<compile_context>
chip_gen: v6e
topology: v6e:2x2x1
jax: 0.10.0
libtpu: 0.0.40
codegen_flags: <defaults>
</compile_context>

<pallas_src>
import jax
import jax.numpy as jnp
from jax import lax
from jax.experimental import pallas as pl
from jax.experimental.pallas import tpu as pltpu

KSIZE = 15
STRIDE = 2
PAD = 7
BN_EPS = 1e-5
HALO = 128                        # lane-aligned halo block; only first 8 lanes used
VMEM_BUDGET = 40 * 1024 * 1024    # target working set (fits v7x's 64 MiB VMEM)
VMEM_CAP = 48 * 1024 * 1024


def _round_up(a, b):
    return (a + b - 1) // b * b


def _vmem_estimate(tn, cin, cout, kc, tl, in_bytes, out_bytes):
    """Rough per-grid-step VMEM bytes: double-buffered blocks + in-kernel temps."""
    c2 = 2 * cout
    blocks = (2 * 2 * tn * cin * tl * in_bytes        # xe/xo main blocks (x2 buf)
              + 2 * 2 * tn * cin * HALO * in_bytes    # xe/xo halo blocks
              + 2 * c2 * kc * in_bytes                # fused weights
              + 2 * tn * cout * tl * out_bytes)       # output block
    temps = (2 * kc + 4 * c2 + 4 * cin) * tl * 4      # patches / acc / taps (per n)
    return blocks + (3 * temps) // 2


def _pick_tiles(n, cin, cout, kc, lout, tile_l, in_bytes, out_bytes):
    tl = min(_round_up(max(int(tile_l), 128), 128), _round_up(lout, 128))
    tn = n
    while tl > 128 and _vmem_estimate(tn, cin, cout, kc, tl, in_bytes,
                                      out_bytes) > VMEM_BUDGET:
        tl -= 128
    while tn > 1 and _vmem_estimate(tn, cin, cout, kc, tl, in_bytes,
                                    out_bytes) > VMEM_BUDGET:
        tn -= 1
        while n % tn:
            tn -= 1
    return tn, tl


def fins_encoder_block(x_ncl, params, *, tile_l=512):
    """x_ncl: [N, C_in, L] (PyTorch layout). Returns [N, C_out, L_out]."""
    wc, bc, ws, bs, g1, be1, g2, be2, alpha = params
    del bc, bs            # conv / skip biases cancel exactly under training-mode BN
    N, Cin, L = x_ncl.shape
    Cout = wc.shape[-1]
    C2 = 2 * Cout
    KC = KSIZE * Cin
    Lout = (L + 2 * PAD - KSIZE) // STRIDE + 1
    dtype = x_ncl.dtype
    ib = jnp.dtype(dtype).itemsize

    TN, TL = _pick_tiles(N, Cin, Cout, KC, Lout, tile_l, ib, ib)
    num_nt = N // TN
    Lout_pad = _round_up(Lout, TL)
    num_lt = Lout_pad // TL
    phase_len = Lout_pad + HALO

    est = _vmem_estimate(TN, Cin, Cout, KC, TL, ib, ib)
    vmem_limit = int(max(min(VMEM_CAP, 2 * est), 32 * 1024 * 1024,
                         (5 * est) // 4))

    # ----------- wrapper glue (layout only: zero-pad + stride-2 phase split) ----
    xp = jnp.pad(x_ncl, ((0, 0), (0, 0), (PAD, 2 * phase_len - PAD - L)))
    xe = xp[:, :, 0::2]           # [N, Cin, phase_len]  (even taps)
    xo = xp[:, :, 1::2]           # [N, Cin, phase_len]  (odd taps)

    # Fused weight: main conv (15 taps) in output rows [:Cout], skip 1x1 conv
    # (== tap k=7) in output rows [Cout:].  One MXU matmul per (n, tile).
    wf = jnp.zeros((KC, C2), jnp.float32)
    wf = wf.at[:, :Cout].set(wc.reshape(KC, Cout).astype(jnp.float32))
    wf = wf.at[7 * Cin:8 * Cin, Cout:].set(ws[0].astype(jnp.float32))
    wf_t = wf.T.astype(dtype)                          # [C2, KC]

    # --------------- common BlockSpecs (grid = (batch tile, Lout tile)) ---------
    main_spec = pl.BlockSpec((TN, Cin, TL), lambda b, i: (b, 0, i))
    halo_spec = pl.BlockSpec((TN, Cin, HALO),
                             lambda b, i: (b, 0, (i + 1) * (TL // HALO)))
    w_spec = pl.BlockSpec((C2, KC), lambda b, i: (0, 0))
    vec_spec = pl.BlockSpec((C2, 1), lambda b, i: (0, 0))
    scalar_spec = pl.BlockSpec((1, 1), lambda b, i: (0, 0))

    def _patches(n, xem_ref, xeh_ref, xom_ref, xoh_ref):
        # im2col for one batch row: [15*Cin, TL], tap-major row order.
        xef = jnp.concatenate([xem_ref[n], xeh_ref[n]], axis=-1)   # [Cin, TL+128]
        xof = jnp.concatenate([xom_ref[n], xoh_ref[n]], axis=-1)
        taps = []
        for k in range(KSIZE):                        # static unroll
            src = xef if k % 2 == 0 else xof
            j = k // 2
            taps.append(src[:, j:j + TL])             # contiguous [Cin, TL]
        return jnp.concatenate(taps, axis=0)          # [KC, TL]

    # --------------------------- pass 1: BN statistics --------------------------
    def stats_kernel(xem_ref, xeh_ref, xom_ref, xoh_ref, wt_ref, stats_ref):
        w = wt_ref[...]
        lane = lax.broadcasted_iota(jnp.int32, (1, TL), 1)
        valid = (pl.program_id(1) * TL + lane) < Lout

        def body(n, carry):
            s, sq = carry
            p = _patches(n, xem_ref, xeh_ref, xom_ref, xoh_ref)
            r = jnp.dot(w, p, preferred_element_type=jnp.float32)  # [C2, TL]
            rm = jnp.where(valid, r, 0.0)
            return (s + jnp.sum(rm, axis=1, keepdims=True),
                    sq + jnp.sum(rm * rm, axis=1, keepdims=True))

        zero = jnp.zeros((C2, 1), jnp.float32)
        s, sq = lax.fori_loop(0, TN, body, (zero, zero))
        stats_ref[...] = jnp.concatenate([s, sq], axis=1)[None, None]

    stats = pl.pallas_call(
        stats_kernel,
        out_shape=jax.ShapeDtypeStruct((num_nt, num_lt, C2, 2), jnp.float32),
        grid=(num_nt, num_lt),
        in_specs=[main_spec, halo_spec, main_spec, halo_spec, w_spec],
        out_specs=pl.BlockSpec((1, 1, C2, 2), lambda b, i: (b, i, 0, 0)),
        compiler_params=pltpu.CompilerParams(
            dimension_semantics=("parallel", "parallel"),
            vmem_limit_bytes=vmem_limit),
    )(xe, xe, xo, xo, wf_t)

    # -------- tiny [2C] reduction + scale/shift in plain JAX (not per-tile) -----
    cnt = float(N * Lout)
    s = jnp.sum(stats[..., 0], axis=(0, 1))
    sq = jnp.sum(stats[..., 1], axis=(0, 1))
    mean = s / cnt
    var = sq / cnt - mean * mean                      # biased variance
    gcat = jnp.concatenate([g1.reshape(-1), g2.reshape(-1)]).astype(jnp.float32)
    betac = jnp.concatenate([be1.reshape(-1), be2.reshape(-1)]).astype(jnp.float32)
    scale = gcat * lax.rsqrt(var + BN_EPS)
    shift = betac - mean * scale
    scale2 = scale.reshape(C2, 1)
    shift2 = shift.reshape(C2, 1)
    alpha2 = alpha.reshape(1, 1).astype(jnp.float32)

    # ------------- pass 2: conv (recomputed) + BN + PReLU + add -----------------
    def out_kernel(xem_ref, xeh_ref, xom_ref, xoh_ref, wt_ref,
                   scale_ref, shift_ref, alpha_ref, out_ref):
        w = wt_ref[...]
        sc = scale_ref[...]                           # [C2, 1]
        sh = shift_ref[...]
        a = alpha_ref[...]                            # [1, 1]

        def body(n, carry):
            p = _patches(n, xem_ref, xeh_ref, xom_ref, xoh_ref)
            r = jnp.dot(w, p, preferred_element_type=jnp.float32)  # [C2, TL]
            y = r * sc + sh
            ym = y[:Cout, :]                          # main branch (post-BN)
            ys = y[Cout:, :]                          # skip branch (post-BN)
            out_ref[n] = (jnp.where(ym >= 0.0, ym, a * ym) + ys).astype(
                out_ref.dtype)
            return carry

        lax.fori_loop(0, TN, body, jnp.int32(0))

    out = pl.pallas_call(
        out_kernel,
        out_shape=jax.ShapeDtypeStruct((N, Cout, Lout_pad), dtype),
        grid=(num_nt, num_lt),
        in_specs=[main_spec, halo_spec, main_spec, halo_spec, w_spec,
                  vec_spec, vec_spec, scalar_spec],
        out_specs=pl.BlockSpec((TN, Cout, TL), lambda b, i: (b, 0, i)),
        compiler_params=pltpu.CompilerParams(
            dimension_semantics=("parallel", "parallel"),
            vmem_limit_bytes=vmem_limit),
    )(xe, xe, xo, xo, wf_t, scale2, shift2, alpha2)

    return out[:, :, :Lout]


def init_params(key, in_channels, out_channels):
    k1, k2, k3, k4 = jax.random.split(key, 4)
    fan_main = in_channels * KSIZE
    wc = jax.random.normal(k1, (KSIZE, in_channels, out_channels),
                           jnp.float32) / jnp.sqrt(float(fan_main))
    bc = (jax.random.normal(k2, (1, 1, out_channels), jnp.float32)
          / jnp.sqrt(float(fan_main)))
    ws = jax.random.normal(k3, (1, in_channels, out_channels),
                           jnp.float32) / jnp.sqrt(float(in_channels))
    bs = (jax.random.normal(k4, (1, 1, out_channels), jnp.float32)
          / jnp.sqrt(float(in_channels)))
    # BatchNorm defaults: gamma=1, beta=0.  PReLU default alpha=0.25.
    g1 = jnp.ones((1, 1, out_channels), jnp.float32)
    be1 = jnp.zeros((1, 1, out_channels), jnp.float32)
    g2 = jnp.ones((1, 1, out_channels), jnp.float32)
    be2 = jnp.zeros((1, 1, out_channels), jnp.float32)
    alpha = jnp.full((1, 1, 1), 0.25, jnp.float32)
    return (wc, bc, ws, bs, g1, be1, g2, be2, alpha)


def _reference(x_ncl, params):
    """Pure-JAX reference (training-mode BN), mirrors the PyTorch forward."""
    wc, bc, ws, bs, g1, be1, g2, be2, alpha = params
    w_main = jnp.transpose(wc, (2, 1, 0))     # [O, I, K]
    w_skip = jnp.transpose(ws, (2, 1, 0))     # [O, I, 1]

    def bn(z, g, b):                          # z: [N, C, L]
        m = jnp.mean(z, axis=(0, 2), keepdims=True)
        v = jnp.mean((z - m) ** 2, axis=(0, 2), keepdims=True)
        return (z - m) * lax.rsqrt(v + BN_EPS) * g.reshape(1, -1, 1) \
            + b.reshape(1, -1, 1)

    out = lax.conv_general_dilated(x_ncl, w_main, (STRIDE,), [(PAD, PAD)],
                                   dimension_numbers=('NCH', 'OIH', 'NCH'))
    out = out + bc.reshape(1, -1, 1)
    out = bn(out, g1, be1)
    out = jnp.where(out >= 0.0, out, alpha.reshape(()) * out)

    sk = lax.conv_general_dilated(x_ncl, w_skip, (STRIDE,), [(0, 0)],
                                  dimension_numbers=('NCH', 'OIH', 'NCH'))
    sk = sk + bs.reshape(1, -1, 1)
    sk = bn(sk, g2, be2)
    return out + sk


if __name__ == "__main__":
    key = jax.random.PRNGKey(0)
    kx, kp = jax.random.split(key)

    N, C_IN, C_OUT, L = 2, 4, 8, 16
    x = jax.random.normal(kx, (N, C_IN, L), jnp.float32)
    params = init_params(kp, C_IN, C_OUT)

    fwd = jax.jit(fins_encoder_block)
    out = jax.block_until_ready(fwd(x, params))

    ref = jax.block_until_ready(_reference(x, params))
    assert out.shape == (N, C_OUT, L // 2), out.shape
    assert jnp.allclose(out, ref, rtol=2e-3, atol=2e-3), \
        float(jnp.max(jnp.abs(out - ref)))

    print("KERNEL_OK")
</pallas_src>

<mosaic_0001>
module attributes {stable_mosaic.version = 11 : i64} {
  func.func @stats_kernel(%arg0: i32, %arg1: i32, %arg2: memref<2x4x128xf32, #tpu.memory_space<vmem>>, %arg3: memref<2x4x128xf32, #tpu.memory_space<vmem>>, %arg4: memref<2x4x128xf32, #tpu.memory_space<vmem>>, %arg5: memref<2x4x128xf32, #tpu.memory_space<vmem>>, %arg6: memref<16x60xf32, #tpu.memory_space<vmem>>, %arg7: memref<1x1x16x2xf32, #tpu.memory_space<vmem>>) attributes {dimension_semantics = [#tpu.dimension_semantics<parallel>, #tpu.dimension_semantics<parallel>], iteration_bounds = array<i64: 1, 1>, scalar_prefetch = 0 : i64, scratch_operands = 0 : i64, tpu.core_type = #tpu.core_type<tc>, window_params = [{transform_indices = @transform_0, window_bounds = array<i64: 2, 4, 128>}, {transform_indices = @transform_1, window_bounds = array<i64: 2, 4, 128>}, {transform_indices = @transform_2, window_bounds = array<i64: 2, 4, 128>}, {transform_indices = @transform_3, window_bounds = array<i64: 2, 4, 128>}, {pipeline_mode = #tpu.pipeline_mode<synchronous>, transform_indices = @transform_4, window_bounds = array<i64: 16, 60>}, {transform_indices = @transform_5, window_bounds = array<i64: 1, 1, 16, 2>}]} {
    %c0 = arith.constant 0 : index
    %c0_0 = arith.constant 0 : index
    %0 = vector.load %arg6[%c0, %c0_0] : memref<16x60xf32, #tpu.memory_space<vmem>>, vector<16x60xf32>
    %1 = tpu.iota {dimensions = array<i32: 1>} : vector<1x128xi32>
    %c128_i32 = arith.constant 128 : i32
    %2 = arith.muli %arg1, %c128_i32 : i32
    %3 = vector.broadcast %2 : i32 to vector<1x128xi32>
    %4 = arith.addi %3, %1 : vector<1x128xi32>
    %c8_i32 = arith.constant 8 : i32
    %5 = vector.broadcast %c8_i32 : i32 to vector<1x128xi32>
    %6 = arith.cmpi slt, %4, %5 : vector<1x128xi32>
    %cst = arith.constant 0.000000e+00 : f32
    %7 = vector.broadcast %cst : f32 to vector<16x1xf32>
    %c0_i32 = arith.constant 0 : i32
    %c2_i32 = arith.constant 2 : i32
    %8 = arith.addi %c0_i32, %c2_i32 : i32
    %c1_i32 = arith.constant 1 : i32
    %9:2 = scf.for %arg8 = %c0_i32 to %8 step %c1_i32 iter_args(%arg9 = %7, %arg10 = %7) -> (vector<16x1xf32>, vector<16x1xf32>)  : i32 {
      %13 = arith.index_cast %arg8 : i32 to index
      %c0_6 = arith.constant 0 : index
      %c0_7 = arith.constant 0 : index
      %14 = vector.load %arg2[%13, %c0_6, %c0_7] : memref<2x4x128xf32, #tpu.memory_space<vmem>>, vector<1x4x128xf32>
      %15 = vector.shape_cast %14 : vector<1x4x128xf32> to vector<4x128xf32>
      %16 = arith.index_cast %arg8 : i32 to index
      %c0_8 = arith.constant 0 : index
      %c0_9 = arith.constant 0 : index
      %17 = vector.load %arg3[%16, %c0_8, %c0_9] : memref<2x4x128xf32, #tpu.memory_space<vmem>>, vector<1x4x128xf32>
      %18 = vector.shape_cast %17 : vector<1x4x128xf32> to vector<4x128xf32>
      %19 = tpu.concatenate %15, %18 in 1 : vector<4x128xf32>, vector<4x128xf32> -> vector<4x256xf32>
      %20 = arith.index_cast %arg8 : i32 to index
      %c0_10 = arith.constant 0 : index
      %c0_11 = arith.constant 0 : index
      %21 = vector.load %arg4[%20, %c0_10, %c0_11] : memref<2x4x128xf32, #tpu.memory_space<vmem>>, vector<1x4x128xf32>
      %22 = vector.shape_cast %21 : vector<1x4x128xf32> to vector<4x128xf32>
      %23 = arith.index_cast %arg8 : i32 to index
      %c0_12 = arith.constant 0 : index
      %c0_13 = arith.constant 0 : index
      %24 = vector.load %arg5[%23, %c0_12, %c0_13] : memref<2x4x128xf32, #tpu.memory_space<vmem>>, vector<1x4x128xf32>
      %25 = vector.shape_cast %24 : vector<1x4x128xf32> to vector<4x128xf32>
      %26 = tpu.concatenate %22, %25 in 1 : vector<4x128xf32>, vector<4x128xf32> -> vector<4x256xf32>
      %27 = vector.extract_strided_slice %19 {offsets = [0, 0], sizes = [4, 128], strides = [1, 1]} : vector<4x256xf32> to vector<4x128xf32>
      %28 = vector.extract_strided_slice %26 {offsets = [0, 0], sizes = [4, 128], strides = [1, 1]} : vector<4x256xf32> to vector<4x128xf32>
      %29 = vector.extract_strided_slice %19 {offsets = [0, 1], sizes = [4, 128], strides = [1, 1]} : vector<4x256xf32> to vector<4x128xf32>
      %30 = vector.extract_strided_slice %26 {offsets = [0, 1], sizes = [4, 128], strides = [1, 1]} : vector<4x256xf32> to vector<4x128xf32>
      %31 = vector.extract_strided_slice %19 {offsets = [0, 2], sizes = [4, 128], strides = [1, 1]} : vector<4x256xf32> to vector<4x128xf32>
      %32 = vector.extract_strided_slice %26 {offsets = [0, 2], sizes = [4, 128], strides = [1, 1]} : vector<4x256xf32> to vector<4x128xf32>
      %33 = vector.extract_strided_slice %19 {offsets = [0, 3], sizes = [4, 128], strides = [1, 1]} : vector<4x256xf32> to vector<4x128xf32>
      %34 = vector.extract_strided_slice %26 {offsets = [0, 3], sizes = [4, 128], strides = [1, 1]} : vector<4x256xf32> to vector<4x128xf32>
      %35 = vector.extract_strided_slice %19 {offsets = [0, 4], sizes = [4, 128], strides = [1, 1]} : vector<4x256xf32> to vector<4x128xf32>
      %36 = vector.extract_strided_slice %26 {offsets = [0, 4], sizes = [4, 128], strides = [1, 1]} : vector<4x256xf32> to vector<4x128xf32>
      %37 = vector.extract_strided_slice %19 {offsets = [0, 5], sizes = [4, 128], strides = [1, 1]} : vector<4x256xf32> to vector<4x128xf32>
      %38 = vector.extract_strided_slice %26 {offsets = [0, 5], sizes = [4, 128], strides = [1, 1]} : vector<4x256xf32> to vector<4x128xf32>
      %39 = vector.extract_strided_slice %19 {offsets = [0, 6], sizes = [4, 128], strides = [1, 1]} : vector<4x256xf32> to vector<4x128xf32>
      %40 = vector.extract_strided_slice %26 {offsets = [0, 6], sizes = [4, 128], strides = [1, 1]} : vector<4x256xf32> to vector<4x128xf32>
      %41 = vector.extract_strided_slice %19 {offsets = [0, 7], sizes = [4, 128], strides = [1, 1]} : vector<4x256xf32> to vector<4x128xf32>
      %42 = tpu.concatenate %27, %28, %29, %30, %31, %32, %33, %34, %35, %36, %37, %38, %39, %40, %41 in 0 : vector<4x128xf32>, vector<4x128xf32>, vector<4x128xf32>, vector<4x128xf32>, vector<4x128xf32>, vector<4x128xf32>, vector<4x128xf32>, vector<4x128xf32>, vector<4x128xf32>, vector<4x128xf32>, vector<4x128xf32>, vector<4x128xf32>, vector<4x128xf32>, vector<4x128xf32>, vector<4x128xf32> -> vector<60x128xf32>
      %cst_14 = arith.constant dense<0.000000e+00> : vector<16x128xf32>
      %43 = tpu.matmul %0, %42, %cst_14 {dimension_numbers = #tpu.dot_dimension_numbers<[1], [0], [0], [1], [0, 0, 1, 1], [], []>} : vector<16x60xf32>, vector<60x128xf32>, vector<16x128xf32> -> vector<16x128xf32>
      %cst_15 = arith.constant 0.000000e+00 : f32
      %44 = vector.shape_cast %6 : vector<1x128xi1> to vector<1x128xi1>
      %45 = vector.broadcast %44 : vector<1x128xi1> to vector<16x128xi1>
      %46 = vector.broadcast %cst_15 : f32 to vector<16x128xf32>
      %47 = arith.select %45, %43, %46 : vector<16x128xi1>, vector<16x128xf32>
      %cst_16 = arith.constant dense<0.000000e+00> : vector<16xf32>
      %48 = vector.multi_reduction <add>, %47, %cst_16 [1] : vector<16x128xf32> to vector<16xf32>
      %49 = vector.shape_cast %48 : vector<16xf32> to vector<16x1xf32>
      %50 = arith.addf %arg9, %49 : vector<16x1xf32>
      %51 = arith.mulf %47, %47 : vector<16x128xf32>
      %cst_17 = arith.constant dense<0.000000e+00> : vector<16xf32>
      %52 = vector.multi_reduction <add>, %51, %cst_17 [1] : vector<16x128xf32> to vector<16xf32>
      %53 = vector.shape_cast %52 : vector<16xf32> to vector<16x1xf32>
      %54 = arith.addf %arg10, %53 : vector<16x1xf32>
      scf.yield %50, %54 : vector<16x1xf32>, vector<16x1xf32>
    }
    %c2_i32_1 = arith.constant 2 : i32
    %10 = tpu.concatenate %9#0, %9#1 in 1 : vector<16x1xf32>, vector<16x1xf32> -> vector<16x2xf32>
    %11 = vector.shape_cast %10 : vector<16x2xf32> to vector<1x1x16x2xf32>
    %c0_2 = arith.constant 0 : index
    %c0_3 = arith.constant 0 : index
    %c0_4 = arith.constant 0 : index
    %c0_5 = arith.constant 0 : index
    %12 = vector.load %arg7[%c0_2, %c0_3, %c0_4, %c0_5] : memref<1x1x16x2xf32, #tpu.memory_space<vmem>>, vector<1x1x16x2xf32>
    tpu.vector_store %arg7[%c0_2, %c0_3, %c0_4, %c0_5], %11 {strides = array<i32>} : memref<1x1x16x2xf32, #tpu.memory_space<vmem>>, vector<1x1x16x2xf32>,
    return
  }
  func.func @transform_0(%arg0: i32, %arg1: i32) -> (i32, i32, i32) {
    %c0_i32 = arith.constant 0 : i32
    %c0_i32_0 = arith.constant 0 : i32
    return %arg0, %c0_i32, %arg1 : i32, i32, i32
  }
  func.func @transform_1(%arg0: i32, %arg1: i32) -> (i32, i32, i32) {
    %c1_i32 = arith.constant 1 : i32
    %0 = arith.addi %arg1, %c1_i32 : i32
    %c1_i32_0 = arith.constant 1 : i32
    %1 = arith.muli %0, %c1_i32_0 : i32
    %c0_i32 = arith.constant 0 : i32
    %c0_i32_1 = arith.constant 0 : i32
    return %arg0, %c0_i32, %1 : i32, i32, i32
  }
  func.func @transform_2(%arg0: i32, %arg1: i32) -> (i32, i32, i32) {
    %c0_i32 = arith.constant 0 : i32
    %c0_i32_0 = arith.constant 0 : i32
    return %arg0, %c0_i32, %arg1 : i32, i32, i32
  }
  func.func @transform_3(%arg0: i32, %arg1: i32) -> (i32, i32, i32) {
    %c1_i32 = arith.constant 1 : i32
    %0 = arith.addi %arg1, %c1_i32 : i32
    %c1_i32_0 = arith.constant 1 : i32
    %1 = arith.muli %0, %c1_i32_0 : i32
    %c0_i32 = arith.constant 0 : i32
    %c0_i32_1 = arith.constant 0 : i32
    return %arg0, %c0_i32, %1 : i32, i32, i32
  }
  func.func @transform_4(%arg0: i32, %arg1: i32) -> (i32, i32) {
    %c0_i32 = arith.constant 0 : i32
    %c0_i32_0 = arith.constant 0 : i32
    %c0_i32_1 = arith.constant 0 : i32
    return %c0_i32, %c0_i32_0 : i32, i32
  }
  func.func @transform_5(%arg0: i32, %arg1: i32) -> (i32, i32, i32, i32) {
    %c0_i32 = arith.constant 0 : i32
    %c0_i32_0 = arith.constant 0 : i32
    %c0_i32_1 = arith.constant 0 : i32
    return %arg0, %arg1, %c0_i32, %c0_i32_0 : i32, i32, i32, i32
  }
}

module attributes {stable_mosaic.version = 11 : i64} {
  func.func @out_kernel(%arg0: i32, %arg1: i32, %arg2: memref<2x4x128xf32, #tpu.memory_space<vmem>>, %arg3: memref<2x4x128xf32, #tpu.memory_space<vmem>>, %arg4: memref<2x4x128xf32, #tpu.memory_space<vmem>>, %arg5: memref<2x4x128xf32, #tpu.memory_space<vmem>>, %arg6: memref<16x60xf32, #tpu.memory_space<vmem>>, %arg7: memref<16x1xf32, #tpu.memory_space<vmem>>, %arg8: memref<16x1xf32, #tpu.memory_space<vmem>>, %arg9: memref<1x1xf32, #tpu.memory_space<vmem>>, %arg10: memref<2x8x128xf32, #tpu.memory_space<vmem>>) attributes {dimension_semantics = [#tpu.dimension_semantics<parallel>, #tpu.dimension_semantics<parallel>], iteration_bounds = array<i64: 1, 1>, scalar_prefetch = 0 : i64, scratch_operands = 0 : i64, tpu.core_type = #tpu.core_type<tc>, window_params = [{transform_indices = @transform_0, window_bounds = array<i64: 2, 4, 128>}, {transform_indices = @transform_1, window_bounds = array<i64: 2, 4, 128>}, {transform_indices = @transform_2, window_bounds = array<i64: 2, 4, 128>}, {transform_indices = @transform_3, window_bounds = array<i64: 2, 4, 128>}, {pipeline_mode = #tpu.pipeline_mode<synchronous>, transform_indices = @transform_4, window_bounds = array<i64: 16, 60>}, {pipeline_mode = #tpu.pipeline_mode<synchronous>, transform_indices = @transform_5, window_bounds = array<i64: 16, 1>}, {pipeline_mode = #tpu.pipeline_mode<synchronous>, transform_indices = @transform_6, window_bounds = array<i64: 16, 1>}, {pipeline_mode = #tpu.pipeline_mode<synchronous>, transform_indices = @transform_7, window_bounds = array<i64: 1, 1>}, {transform_indices = @transform_8, window_bounds = array<i64: 2, 8, 128>}]} {
    %c0 = arith.constant 0 : index
    %c0_0 = arith.constant 0 : index
    %0 = vector.load %arg6[%c0, %c0_0] : memref<16x60xf32, #tpu.memory_space<vmem>>, vector<16x60xf32>
    %c0_1 = arith.constant 0 : index
    %c0_2 = arith.constant 0 : index
    %1 = vector.load %arg7[%c0_1, %c0_2] : memref<16x1xf32, #tpu.memory_space<vmem>>, vector<16x1xf32>
    %c0_3 = arith.constant 0 : index
    %c0_4 = arith.constant 0 : index
    %2 = vector.load %arg8[%c0_3, %c0_4] : memref<16x1xf32, #tpu.memory_space<vmem>>, vector<16x1xf32>
    %c0_5 = arith.constant 0 : index
    %c0_6 = arith.constant 0 : index
    %3 = vector.load %arg9[%c0_5, %c0_6] : memref<1x1xf32, #tpu.memory_space<vmem>>, vector<1x1xf32>
    %c0_i32 = arith.constant 0 : i32
    %c2_i32 = arith.constant 2 : i32
    %4 = arith.addi %c0_i32, %c2_i32 : i32
    %c1_i32 = arith.constant 1 : i32
    scf.for %arg11 = %c0_i32 to %4 step %c1_i32  : i32 {
      %5 = arith.index_cast %arg11 : i32 to index
      %c0_8 = arith.constant 0 : index
      %c0_9 = arith.constant 0 : index
      %6 = vector.load %arg2[%5, %c0_8, %c0_9] : memref<2x4x128xf32, #tpu.memory_space<vmem>>, vector<1x4x128xf32>
      %7 = vector.shape_cast %6 : vector<1x4x128xf32> to vector<4x128xf32>
      %8 = arith.index_cast %arg11 : i32 to index
      %c0_10 = arith.constant 0 : index
      %c0_11 = arith.constant 0 : index
      %9 = vector.load %arg3[%8, %c0_10, %c0_11] : memref<2x4x128xf32, #tpu.memory_space<vmem>>, vector<1x4x128xf32>
      %10 = vector.shape_cast %9 : vector<1x4x128xf32> to vector<4x128xf32>
      %11 = tpu.concatenate %7, %10 in 1 : vector<4x128xf32>, vector<4x128xf32> -> vector<4x256xf32>
      %12 = arith.index_cast %arg11 : i32 to index
      %c0_12 = arith.constant 0 : index
      %c0_13 = arith.constant 0 : index
      %13 = vector.load %arg4[%12, %c0_12, %c0_13] : memref<2x4x128xf32, #tpu.memory_space<vmem>>, vector<1x4x128xf32>
      %14 = vector.shape_cast %13 : vector<1x4x128xf32> to vector<4x128xf32>
      %15 = arith.index_cast %arg11 : i32 to index
      %c0_14 = arith.constant 0 : index
      %c0_15 = arith.constant 0 : index
      %16 = vector.load %arg5[%15, %c0_14, %c0_15] : memref<2x4x128xf32, #tpu.memory_space<vmem>>, vector<1x4x128xf32>
      %17 = vector.shape_cast %16 : vector<1x4x128xf32> to vector<4x128xf32>
      %18 = tpu.concatenate %14, %17 in 1 : vector<4x128xf32>, vector<4x128xf32> -> vector<4x256xf32>
      %19 = vector.extract_strided_slice %11 {offsets = [0, 0], sizes = [4, 128], strides = [1, 1]} : vector<4x256xf32> to vector<4x128xf32>
      %20 = vector.extract_strided_slice %18 {offsets = [0, 0], sizes = [4, 128], strides = [1, 1]} : vector<4x256xf32> to vector<4x128xf32>
      %21 = vector.extract_strided_slice %11 {offsets = [0, 1], sizes = [4, 128], strides = [1, 1]} : vector<4x256xf32> to vector<4x128xf32>
      %22 = vector.extract_strided_slice %18 {offsets = [0, 1], sizes = [4, 128], strides = [1, 1]} : vector<4x256xf32> to vector<4x128xf32>
      %23 = vector.extract_strided_slice %11 {offsets = [0, 2], sizes = [4, 128], strides = [1, 1]} : vector<4x256xf32> to vector<4x128xf32>
      %24 = vector.extract_strided_slice %18 {offsets = [0, 2], sizes = [4, 128], strides = [1, 1]} : vector<4x256xf32> to vector<4x128xf32>
      %25 = vector.extract_strided_slice %11 {offsets = [0, 3], sizes = [4, 128], strides = [1, 1]} : vector<4x256xf32> to vector<4x128xf32>
      %26 = vector.extract_strided_slice %18 {offsets = [0, 3], sizes = [4, 128], strides = [1, 1]} : vector<4x256xf32> to vector<4x128xf32>
      %27 = vector.extract_strided_slice %11 {offsets = [0, 4], sizes = [4, 128], strides = [1, 1]} : vector<4x256xf32> to vector<4x128xf32>
      %28 = vector.extract_strided_slice %18 {offsets = [0, 4], sizes = [4, 128], strides = [1, 1]} : vector<4x256xf32> to vector<4x128xf32>
      %29 = vector.extract_strided_slice %11 {offsets = [0, 5], sizes = [4, 128], strides = [1, 1]} : vector<4x256xf32> to vector<4x128xf32>
      %30 = vector.extract_strided_slice %18 {offsets = [0, 5], sizes = [4, 128], strides = [1, 1]} : vector<4x256xf32> to vector<4x128xf32>
      %31 = vector.extract_strided_slice %11 {offsets = [0, 6], sizes = [4, 128], strides = [1, 1]} : vector<4x256xf32> to vector<4x128xf32>
      %32 = vector.extract_strided_slice %18 {offsets = [0, 6], sizes = [4, 128], strides = [1, 1]} : vector<4x256xf32> to vector<4x128xf32>
      %33 = vector.extract_strided_slice %11 {offsets = [0, 7], sizes = [4, 128], strides = [1, 1]} : vector<4x256xf32> to vector<4x128xf32>
      %34 = tpu.concatenate %19, %20, %21, %22, %23, %24, %25, %26, %27, %28, %29, %30, %31, %32, %33 in 0 : vector<4x128xf32>, vector<4x128xf32>, vector<4x128xf32>, vector<4x128xf32>, vector<4x128xf32>, vector<4x128xf32>, vector<4x128xf32>, vector<4x128xf32>, vector<4x128xf32>, vector<4x128xf32>, vector<4x128xf32>, vector<4x128xf32>, vector<4x128xf32>, vector<4x128xf32>, vector<4x128xf32> -> vector<60x128xf32>
      %cst = arith.constant dense<0.000000e+00> : vector<16x128xf32>
      %35 = tpu.matmul %0, %34, %cst {dimension_numbers = #tpu.dot_dimension_numbers<[1], [0], [0], [1], [0, 0, 1, 1], [], []>} : vector<16x60xf32>, vector<60x128xf32>, vector<16x128xf32> -> vector<16x128xf32>
      %36 = vector.broadcast %1 : vector<16x1xf32> to vector<16x128xf32>
      %37 = arith.mulf %35, %36 : vector<16x128xf32>
      %38 = vector.broadcast %2 : vector<16x1xf32> to vector<16x128xf32>
      %39 = arith.addf %37, %38 : vector<16x128xf32>
      %40 = vector.extract_strided_slice %39 {offsets = [0, 0], sizes = [8, 128], strides = [1, 1]} : vector<16x128xf32> to vector<8x128xf32>
      %41 = vector.extract_strided_slice %39 {offsets = [8, 0], sizes = [8, 128], strides = [1, 1]} : vector<16x128xf32> to vector<8x128xf32>
      %cst_16 = arith.constant 0.000000e+00 : f32
      %42 = vector.broadcast %cst_16 : f32 to vector<8x128xf32>
      %43 = arith.cmpf oge, %40, %42 : vector<8x128xf32>
      %44 = vector.broadcast %3 : vector<1x1xf32> to vector<8x128xf32>
      %45 = arith.mulf %44, %40 : vector<8x128xf32>
      %46 = arith.select %43, %40, %45 : vector<8x128xi1>, vector<8x128xf32>
      %47 = arith.addf %46, %41 : vector<8x128xf32>
      %48 = arith.index_cast %arg11 : i32 to index
      %c0_17 = arith.constant 0 : index
      %c0_18 = arith.constant 0 : index
      %49 = vector.load %arg10[%48, %c0_17, %c0_18] : memref<2x8x128xf32, #tpu.memory_space<vmem>>, vector<1x8x128xf32>
      %50 = vector.shape_cast %49 : vector<1x8x128xf32> to vector<8x128xf32>
      %51 = vector.shape_cast %47 : vector<8x128xf32> to vector<1x8x128xf32>
      tpu.vector_store %arg10[%48, %c0_17, %c0_18], %51 {strides = array<i32>} : memref<2x8x128xf32, #tpu.memory_space<vmem>>, vector<1x8x128xf32>,
    }
    %c2_i32_7 = arith.constant 2 : i32
    return
  }
  func.func @transform_0(%arg0: i32, %arg1: i32) -> (i32, i32, i32) {
    %c0_i32 = arith.constant 0 : i32
    %c0_i32_0 = arith.constant 0 : i32
    return %arg0, %c0_i32, %arg1 : i32, i32, i32
  }
  func.func @transform_1(%arg0: i32, %arg1: i32) -> (i32, i32, i32) {
    %c1_i32 = arith.constant 1 : i32
    %0 = arith.addi %arg1, %c1_i32 : i32
    %c1_i32_0 = arith.constant 1 : i32
    %1 = arith.muli %0, %c1_i32_0 : i32
    %c0_i32 = arith.constant 0 : i32
    %c0_i32_1 = arith.constant 0 : i32
    return %arg0, %c0_i32, %1 : i32, i32, i32
  }
  func.func @transform_2(%arg0: i32, %arg1: i32) -> (i32, i32, i32) {
    %c0_i32 = arith.constant 0 : i32
    %c0_i32_0 = arith.constant 0 : i32
    return %arg0, %c0_i32, %arg1 : i32, i32, i32
  }
  func.func @transform_3(%arg0: i32, %arg1: i32) -> (i32, i32, i32) {
    %c1_i32 = arith.constant 1 : i32
    %0 = arith.addi %arg1, %c1_i32 : i32
    %c1_i32_0 = arith.constant 1 : i32
    %1 = arith.muli %0, %c1_i32_0 : i32
    %c0_i32 = arith.constant 0 : i32
    %c0_i32_1 = arith.constant 0 : i32
    return %arg0, %c0_i32, %1 : i32, i32, i32
  }
  func.func @transform_4(%arg0: i32, %arg1: i32) -> (i32, i32) {
    %c0_i32 = arith.constant 0 : i32
    %c0_i32_0 = arith.constant 0 : i32
    %c0_i32_1 = arith.constant 0 : i32
    return %c0_i32, %c0_i32_0 : i32, i32
  }
  func.func @transform_5(%arg0: i32, %arg1: i32) -> (i32, i32) {
    %c0_i32 = arith.constant 0 : i32
    %c0_i32_0 = arith.constant 0 : i32
    %c0_i32_1 = arith.constant 0 : i32
    return %c0_i32, %c0_i32_0 : i32, i32
  }
  func.func @transform_6(%arg0: i32, %arg1: i32) -> (i32, i32) {
    %c0_i32 = arith.constant 0 : i32
    %c0_i32_0 = arith.constant 0 : i32
    %c0_i32_1 = arith.constant 0 : i32
    return %c0_i32, %c0_i32_0 : i32, i32
  }
  func.func @transform_7(%arg0: i32, %arg1: i32) -> (i32, i32) {
    %c0_i32 = arith.constant 0 : i32
    %c0_i32_0 = arith.constant 0 : i32
    %c0_i32_1 = arith.constant 0 : i32
    return %c0_i32, %c0_i32_0 : i32, i32
  }
  func.func @transform_8(%arg0: i32, %arg1: i32) -> (i32, i32, i32) {
    %c0_i32 = arith.constant 0 : i32
    %c0_i32_0 = arith.constant 0 : i32
    return %arg0, %c0_i32, %arg1 : i32, i32, i32
  }
}

</mosaic_0001>

<llo_original>
// kernel: fins_encoder_block.2
$region0: #{fins_encoder_block.2}
  #allocation0 [shape = 'u32[]', space=smem, size = 0x4, offset = 0x4, fixed_abs, tag = 'smem constant byte address 0x4 - core index']
  #allocation1 [shape = 'u32[144,128]{1,0:T(1,128)}', space=vmem, size = 0x12000, scoped, tag = 'internal scratch']
  %s0 = inlined_call_operand.vmem [shape: f32[2,4,256], index: 0, kind: input, shape index: {}, may-alias: {0,1}]
  %s1 = inlined_call_operand.vmem [shape: f32[2,4,256], index: 1, kind: input, shape index: {}, may-alias: {0,1}]
  %s2 = inlined_call_operand.vmem [shape: f32[2,4,256], index: 2, kind: input, shape index: {}, may-alias: {2,3}]
  %s3 = inlined_call_operand.vmem [shape: f32[2,4,256], index: 3, kind: input, shape index: {}, may-alias: {2,3}]
  %s4 = inlined_call_operand.vmem [shape: f32[16,60], index: 4, kind: input, shape index: {}]
  %s5 = inlined_call_operand.vmem [shape: f32[1,1,16,2], index: 5, kind: output, shape index: {}]
  %s6 = sld [smem:[#allocation0]]
  $region201: #{fins_encoder_block.2} parent=0
    _
  %s8 = ssub.s32 1, %s6
  %s9 = scalar_select 0, %s8, %s6
  $region1: #{fins_encoder_block.2} parent=0
    #allocation2 [shape = 'u8[4096]{0}', space=vmem, size = 0x1000, scoped, tag = 'input window, operand 0, single buffered']
    #allocation3 [shape = 'u8[4096]{0}', space=vmem, size = 0x1000, scoped, tag = 'input window, operand 1, single buffered']
    #allocation4 [shape = 'u8[4096]{0}', space=vmem, size = 0x1000, scoped, tag = 'input window, operand 2, single buffered']
    #allocation5 [shape = 'u8[4096]{0}', space=vmem, size = 0x1000, scoped, tag = 'input window, operand 3, single buffered']
    // Predicated region
    $region2: #{fins_encoder_block.2} parent=1 // pred_check
      _
    $region3: #{fins_encoder_block.2} parent=1 // pred_check_branch
      %11 = sbr.rel (0) target = $region5
    $region4: #{fins_encoder_block.2} parent=1 // pred_region
      // Predicated region
      $region6: #{fins_encoder_block.2} parent=4 // pred_check
        _
      $region7: #{fins_encoder_block.2} parent=4 // pred_check_branch
        %13 = sbr.rel (0) target = $region9
      $region8: #{fins_encoder_block.2} parent=4 // pred_region
        // Predicated region
        $region10: #{fins_encoder_block.2} parent=8 // pred_check
          _
        $region11: #{fins_encoder_block.2} parent=8 // pred_check_branch
          %15 = sbr.rel target = $region13
        $region12: #{fins_encoder_block.2} parent=8 // pred_region
          // Predicated region
          $region25: #{fins_encoder_block.2} parent=12 // pred_check
            _
          $region26: #{fins_encoder_block.2} parent=12 // pred_check_branch
            %33 = sbr.rel (0) target = $region28
          $region27: #{fins_encoder_block.2} parent=12 // pred_region
            loop: start=0, step=1, limit=1
            $region29: #{fins_encoder_block.2} parent=27 // loop_pre_header
              _
            $region30: #{fins_encoder_block.2} parent=27 // loop_header
              %s35 = sphi 0, %s39
              %p36 = scmp.ge.s32.totalorder %s35, 1
              %s40 = sphi %s0, %s0
              %s41 = sphi [#allocation2], [#allocation2]
            $region31: #{fins_encoder_block.2} parent=27 // loop_header_branch
              %38 = sbr.rel (%p36) target = $region35
            $region32: #{fins_encoder_block.2} parent=27 // loop_body
              _
            $region33: #{fins_encoder_block.2} parent=27 // loop_footer
              %s39 = sadd.s32 1, %s35
            $region34: #{fins_encoder_block.2} parent=27 // loop_footer_branch
              %34 = sbr.rel target = $region30
            $region35: #{fins_encoder_block.2} parent=27 // loop_exit
              _
            %s43 = ssub.s32 16, 1
            loop: start=0, step=1, limit=1
            $region36: #{fins_encoder_block.2} parent=27 // loop_pre_header
              _
            $region37: #{fins_encoder_block.2} parent=27 // loop_header
              %s45 = sphi 0, %s49
              %p46 = scmp.ge.s32.totalorder %s45, 1
              %s50 = sphi %s0, %s0
              %s51 = sphi [#allocation2], [#allocation2]
            $region38: #{fins_encoder_block.2} parent=27 // loop_header_branch
              %48 = sbr.rel (%p46) target = $region42
            $region39: #{fins_encoder_block.2} parent=27 // loop_body
              %v52 = vld [vmem:[%s50] sm:%s43]
              %53 = vst [vmem:[%s51] sm:%s43] %v52
              %v54 = vld [vmem:[%s50 + $0x8] sm:%s43]
              %55 = vst [vmem:[%s51 + $0x4] sm:%s43] %v54
            $region40: #{fins_encoder_block.2} parent=27 // loop_footer
              %s49 = sadd.s32 1, %s45
            $region41: #{fins_encoder_block.2} parent=27 // loop_footer_branch
              %44 = sbr.rel target = $region37
            $region42: #{fins_encoder_block.2} parent=27 // loop_exit
              _
          $region28: #{fins_encoder_block.2} parent=12 // pred_fallthru
            _
        $region13: #{fins_encoder_block.2} parent=8 // pred_fallthru
          _
        // Predicated region
        $region14: #{fins_encoder_block.2} parent=8 // pred_check
          _
        $region15: #{fins_encoder_block.2} parent=8 // pred_check_branch
          %17 = sbr.rel (0) target = $region17
        $region16: #{fins_encoder_block.2} parent=8 // pred_region
          %s19 = ssub.s32 16, 1
          loop: start=0, step=1, limit=1
          $region18: #{fins_encoder_block.2} parent=16 // loop_pre_header
            _
          $region19: #{fins_encoder_block.2} parent=16 // loop_header
            %s21 = sphi 0, %s25
            %p22 = scmp.ge.s32.totalorder %s21, 1
            %s26 = sphi %s0, %s0
            %s27 = sphi [#allocation2], [#allocation2]
          $region20: #{fins_encoder_block.2} parent=16 // loop_header_branch
            %24 = sbr.rel (%p22) target = $region24
          $region21: #{fins_encoder_block.2} parent=16 // loop_body
            %v28 = vld [vmem:[%s26] sm:%s19]
            %29 = vst [vmem:[%s27] sm:%s19] %v28
            %v30 = vld [vmem:[%s26 + $0x8] sm:%s19]
            %31 = vst [vmem:[%s27 + $0x4] sm:%s19] %v30
          $region22: #{fins_encoder_block.2} parent=16 // loop_footer
            %s25 = sadd.s32 1, %s21
          $region23: #{fins_encoder_block.2} parent=16 // loop_footer_branch
            %20 = sbr.rel target = $region19
          $region24: #{fins_encoder_block.2} parent=16 // loop_exit
            _
        $region17: #{fins_encoder_block.2} parent=8 // pred_fallthru
          _
      $region9: #{fins_encoder_block.2} parent=4 // pred_fallthru
        _
      %56 = vnop
    $region5: #{fins_encoder_block.2} parent=1 // pred_fallthru
      _
    // Predicated region
    $region43: #{fins_encoder_block.2} parent=1 // pred_check
      _
    $region44: #{fins_encoder_block.2} parent=1 // pred_check_branch
      %58 = sbr.rel (0) target = $region46
    $region45: #{fins_encoder_block.2} parent=1 // pred_region
      %s59 = sadd.s32 0, 1
      %s60 = smul.addr %s59, 4
      %s61 = scalar_lea.vmem %s1, %s60
      // Predicated region
      $region47: #{fins_encoder_block.2} parent=45 // pred_check
        _
      $region48: #{fins_encoder_block.2} parent=45 // pred_check_branch
        %63 = sbr.rel (0) target = $region50
      $region49: #{fins_encoder_block.2} parent=45 // pred_region
        // Predicated region
        $region51: #{fins_encoder_block.2} parent=49 // pred_check
          _
        $region52: #{fins_encoder_block.2} parent=49 // pred_check_branch
          %65 = sbr.rel target = $region54
        $region53: #{fins_encoder_block.2} parent=49 // pred_region
          // Predicated region
          $region66: #{fins_encoder_block.2} parent=53 // pred_check
            _
          $region67: #{fins_encoder_block.2} parent=53 // pred_check_branch
            %83 = sbr.rel (0) target = $region69
          $region68: #{fins_encoder_block.2} parent=53 // pred_region
            loop: start=0, step=1, limit=1
            $region70: #{fins_encoder_block.2} parent=68 // loop_pre_header
              _
            $region71: #{fins_encoder_block.2} parent=68 // loop_header
              %s85 = sphi 0, %s89
              %p86 = scmp.ge.s32.totalorder %s85, 1
              %s90 = sphi %s61, %s61
              %s91 = sphi [#allocation3], [#allocation3]
            $region72: #{fins_encoder_block.2} parent=68 // loop_header_branch
              %88 = sbr.rel (%p86) target = $region76
            $region73: #{fins_encoder_block.2} parent=68 // loop_body
              _
            $region74: #{fins_encoder_block.2} parent=68 // loop_footer
              %s89 = sadd.s32 1, %s85
            $region75: #{fins_encoder_block.2} parent=68 // loop_footer_branch
              %84 = sbr.rel target = $region71
            $region76: #{fins_encoder_block.2} parent=68 // loop_exit
              _
            %s93 = ssub.s32 16, 1
            loop: start=0, step=1, limit=1
            $region77: #{fins_encoder_block.2} parent=68 // loop_pre_header
              _
            $region78: #{fins_encoder_block.2} parent=68 // loop_header
              %s95 = sphi 0, %s99
              %p96 = scmp.ge.s32.totalorder %s95, 1
              %s100 = sphi %s61, %s61
              %s101 = sphi [#allocation3], [#allocation3]
            $region79: #{fins_encoder_block.2} parent=68 // loop_header_branch
              %98 = sbr.rel (%p96) target = $region83
            $region80: #{fins_encoder_block.2} parent=68 // loop_body
              %v102 = vld [vmem:[%s100] sm:%s93]
              %103 = vst [vmem:[%s101] sm:%s93] %v102
              %v104 = vld [vmem:[%s100 + $0x8] sm:%s93]
              %105 = vst [vmem:[%s101 + $0x4] sm:%s93] %v104
            $region81: #{fins_encoder_block.2} parent=68 // loop_footer
              %s99 = sadd.s32 1, %s95
            $region82: #{fins_encoder_block.2} parent=68 // loop_footer_branch
              %94 = sbr.rel target = $region78
            $region83: #{fins_encoder_block.2} parent=68 // loop_exit
              _
          $region69: #{fins_encoder_block.2} parent=53 // pred_fallthru
            _
        $region54: #{fins_encoder_block.2} parent=49 // pred_fallthru
          _
        // Predicated region
        $region55: #{fins_encoder_block.2} parent=49 // pred_check
          _
        $region56: #{fins_encoder_block.2} parent=49 // pred_check_branch
          %67 = sbr.rel (0) target = $region58
        $region57: #{fins_encoder_block.2} parent=49 // pred_region
          %s69 = ssub.s32 16, 1
          loop: start=0, step=1, limit=1
          $region59: #{fins_encoder_block.2} parent=57 // loop_pre_header
            _
          $region60: #{fins_encoder_block.2} parent=57 // loop_header
            %s71 = sphi 0, %s75
            %p72 = scmp.ge.s32.totalorder %s71, 1
            %s76 = sphi %s61, %s61
            %s77 = sphi [#allocation3], [#allocation3]
          $region61: #{fins_encoder_block.2} parent=57 // loop_header_branch
            %74 = sbr.rel (%p72) target = $region65
          $region62: #{fins_encoder_block.2} parent=57 // loop_body
            %v78 = vld [vmem:[%s76] sm:%s69]
            %79 = vst [vmem:[%s77] sm:%s69] %v78
            %v80 = vld [vmem:[%s76 + $0x8] sm:%s69]
            %81 = vst [vmem:[%s77 + $0x4] sm:%s69] %v80
          $region63: #{fins_encoder_block.2} parent=57 // loop_footer
            %s75 = sadd.s32 1, %s71
          $region64: #{fins_encoder_block.2} parent=57 // loop_footer_branch
            %70 = sbr.rel target = $region60
          $region65: #{fins_encoder_block.2} parent=57 // loop_exit
            _
        $region58: #{fins_encoder_block.2} parent=49 // pred_fallthru
          _
      $region50: #{fins_encoder_block.2} parent=45 // pred_fallthru
        _
      %106 = vnop
    $region46: #{fins_encoder_block.2} parent=1 // pred_fallthru
      _
    // Predicated region
    $region84: #{fins_encoder_block.2} parent=1 // pred_check
      _
    $region85: #{fins_encoder_block.2} parent=1 // pred_check_branch
      %108 = sbr.rel (0) target = $region87
    $region86: #{fins_encoder_block.2} parent=1 // pred_region
      // Predicated region
      $region88: #{fins_encoder_block.2} parent=86 // pred_check
        _
      $region89: #{fins_encoder_block.2} parent=86 // pred_check_branch
        %110 = sbr.rel (0) target = $region91
      $region90: #{fins_encoder_block.2} parent=86 // pred_region
        // Predicated region
        $region92: #{fins_encoder_block.2} parent=90 // pred_check
          _
        $region93: #{fins_encoder_block.2} parent=90 // pred_check_branch
          %112 = sbr.rel target = $region95
        $region94: #{fins_encoder_block.2} parent=90 // pred_region
          // Predicated region
          $region107: #{fins_encoder_block.2} parent=94 // pred_check
            _
          $region108: #{fins_encoder_block.2} parent=94 // pred_check_branch
            %130 = sbr.rel (0) target = $region110
          $region109: #{fins_encoder_block.2} parent=94 // pred_region
            loop: start=0, step=1, limit=1
            $region111: #{fins_encoder_block.2} parent=109 // loop_pre_header
              _
            $region112: #{fins_encoder_block.2} parent=109 // loop_header
              %s132 = sphi 0, %s136
              %p133 = scmp.ge.s32.totalorder %s132, 1
              %s137 = sphi %s2, %s2
              %s138 = sphi [#allocation4], [#allocation4]
            $region113: #{fins_encoder_block.2} parent=109 // loop_header_branch
              %135 = sbr.rel (%p133) target = $region117
            $region114: #{fins_encoder_block.2} parent=109 // loop_body
              _
            $region115: #{fins_encoder_block.2} parent=109 // loop_footer
              %s136 = sadd.s32 1, %s132
            $region116: #{fins_encoder_block.2} parent=109 // loop_footer_branch
              %131 = sbr.rel target = $region112
            $region117: #{fins_encoder_block.2} parent=109 // loop_exit
              _
            %s140 = ssub.s32 16, 1
            loop: start=0, step=1, limit=1
            $region118: #{fins_encoder_block.2} parent=109 // loop_pre_header
              _
            $region119: #{fins_encoder_block.2} parent=109 // loop_header
              %s142 = sphi 0, %s146
              %p143 = scmp.ge.s32.totalorder %s142, 1
              %s147 = sphi %s2, %s2
              %s148 = sphi [#allocation4], [#allocation4]
            $region120: #{fins_encoder_block.2} parent=109 // loop_header_branch
              %145 = sbr.rel (%p143) target = $region124
            $region121: #{fins_encoder_block.2} parent=109 // loop_body
              %v149 = vld [vmem:[%s147] sm:%s140]
              %150 = vst [vmem:[%s148] sm:%s140] %v149
              %v151 = vld [vmem:[%s147 + $0x8] sm:%s140]
              %152 = vst [vmem:[%s148 + $0x4] sm:%s140] %v151
            $region122: #{fins_encoder_block.2} parent=109 // loop_footer
              %s146 = sadd.s32 1, %s142
            $region123: #{fins_encoder_block.2} parent=109 // loop_footer_branch
              %141 = sbr.rel target = $region119
            $region124: #{fins_encoder_block.2} parent=109 // loop_exit
              _
          $region110: #{fins_encoder_block.2} parent=94 // pred_fallthru
            _
        $region95: #{fins_encoder_block.2} parent=90 // pred_fallthru
          _
        // Predicated region
        $region96: #{fins_encoder_block.2} parent=90 // pred_check
          _
        $region97: #{fins_encoder_block.2} parent=90 // pred_check_branch
          %114 = sbr.rel (0) target = $region99
        $region98: #{fins_encoder_block.2} parent=90 // pred_region
          %s116 = ssub.s32 16, 1
          loop: start=0, step=1, limit=1
          $region100: #{fins_encoder_block.2} parent=98 // loop_pre_header
            _
          $region101: #{fins_encoder_block.2} parent=98 // loop_header
            %s118 = sphi 0, %s122
            %p119 = scmp.ge.s32.totalorder %s118, 1
            %s123 = sphi %s2, %s2
            %s124 = sphi [#allocation4], [#allocation4]
          $region102: #{fins_encoder_block.2} parent=98 // loop_header_branch
            %121 = sbr.rel (%p119) target = $region106
          $region103: #{fins_encoder_block.2} parent=98 // loop_body
            %v125 = vld [vmem:[%s123] sm:%s116]
            %126 = vst [vmem:[%s124] sm:%s116] %v125
            %v127 = vld [vmem:[%s123 + $0x8] sm:%s116]
            %128 = vst [vmem:[%s124 + $0x4] sm:%s116] %v127
          $region104: #{fins_encoder_block.2} parent=98 // loop_footer
            %s122 = sadd.s32 1, %s118
          $region105: #{fins_encoder_block.2} parent=98 // loop_footer_branch
            %117 = sbr.rel target = $region101
          $region106: #{fins_encoder_block.2} parent=98 // loop_exit
            _
        $region99: #{fins_encoder_block.2} parent=90 // pred_fallthru
          _
      $region91: #{fins_encoder_block.2} parent=86 // pred_fallthru
        _
      %153 = vnop
    $region87: #{fins_encoder_block.2} parent=1 // pred_fallthru
      _
    // Predicated region
    $region125: #{fins_encoder_block.2} parent=1 // pred_check
      _
    $region126: #{fins_encoder_block.2} parent=1 // pred_check_branch
      %155 = sbr.rel (0) target = $region128
    $region127: #{fins_encoder_block.2} parent=1 // pred_region
      %s156 = sadd.s32 0, 1
      %s157 = smul.addr %s156, 4
      %s158 = scalar_lea.vmem %s3, %s157
      // Predicated region
      $region129: #{fins_encoder_block.2} parent=127 // pred_check
        _
      $region130: #{fins_encoder_block.2} parent=127 // pred_check_branch
        %160 = sbr.rel (0) target = $region132
      $region131: #{fins_encoder_block.2} parent=127 // pred_region
        // Predicated region
        $region133: #{fins_encoder_block.2} parent=131 // pred_check
          _
        $region134: #{fins_encoder_block.2} parent=131 // pred_check_branch
          %162 = sbr.rel target = $region136
        $region135: #{fins_encoder_block.2} parent=131 // pred_region
          // Predicated region
          $region148: #{fins_encoder_block.2} parent=135 // pred_check
            _
          $region149: #{fins_encoder_block.2} parent=135 // pred_check_branch
            %180 = sbr.rel (0) target = $region151
          $region150: #{fins_encoder_block.2} parent=135 // pred_region
            loop: start=0, step=1, limit=1
            $region152: #{fins_encoder_block.2} parent=150 // loop_pre_header
              _
            $region153: #{fins_encoder_block.2} parent=150 // loop_header
              %s182 = sphi 0, %s186
              %p183 = scmp.ge.s32.totalorder %s182, 1
              %s187 = sphi %s158, %s158
              %s188 = sphi [#allocation5], [#allocation5]
            $region154: #{fins_encoder_block.2} parent=150 // loop_header_branch
              %185 = sbr.rel (%p183) target = $region158
            $region155: #{fins_encoder_block.2} parent=150 // loop_body
              _
            $region156: #{fins_encoder_block.2} parent=150 // loop_footer
              %s186 = sadd.s32 1, %s182
            $region157: #{fins_encoder_block.2} parent=150 // loop_footer_branch
              %181 = sbr.rel target = $region153
            $region158: #{fins_encoder_block.2} parent=150 // loop_exit
              _
            %s190 = ssub.s32 16, 1
            loop: start=0, step=1, limit=1
            $region159: #{fins_encoder_block.2} parent=150 // loop_pre_header
              _
            $region160: #{fins_encoder_block.2} parent=150 // loop_header
              %s192 = sphi 0, %s196
              %p193 = scmp.ge.s32.totalorder %s192, 1
              %s197 = sphi %s158, %s158
              %s198 = sphi [#allocation5], [#allocation5]
            $region161: #{fins_encoder_block.2} parent=150 // loop_header_branch
              %195 = sbr.rel (%p193) target = $region165
            $region162: #{fins_encoder_block.2} parent=150 // loop_body
              %v199 = vld [vmem:[%s197] sm:%s190]
              %200 = vst [vmem:[%s198] sm:%s190] %v199
              %v201 = vld [vmem:[%s197 + $0x8] sm:%s190]
              %202 = vst [vmem:[%s198 + $0x4] sm:%s190] %v201
            $region163: #{fins_encoder_block.2} parent=150 // loop_footer
              %s196 = sadd.s32 1, %s192
            $region164: #{fins_encoder_block.2} parent=150 // loop_footer_branch
              %191 = sbr.rel target = $region160
            $region165: #{fins_encoder_block.2} parent=150 // loop_exit
              _
          $region151: #{fins_encoder_block.2} parent=135 // pred_fallthru
            _
        $region136: #{fins_encoder_block.2} parent=131 // pred_fallthru
          _
        // Predicated region
        $region137: #{fins_encoder_block.2} parent=131 // pred_check
          _
        $region138: #{fins_encoder_block.2} parent=131 // pred_check_branch
          %164 = sbr.rel (0) target = $region140
        $region139: #{fins_encoder_block.2} parent=131 // pred_region
          %s166 = ssub.s32 16, 1
          loop: start=0, step=1, limit=1
          $region141: #{fins_encoder_block.2} parent=139 // loop_pre_header
            _
          $region142: #{fins_encoder_block.2} parent=139 // loop_header
            %s168 = sphi 0, %s172
            %p169 = scmp.ge.s32.totalorder %s168, 1
            %s173 = sphi %s158, %s158
            %s174 = sphi [#allocation5], [#allocation5]
          $region143: #{fins_encoder_block.2} parent=139 // loop_header_branch
            %171 = sbr.rel (%p169) target = $region147
          $region144: #{fins_encoder_block.2} parent=139 // loop_body
            %v175 = vld [vmem:[%s173] sm:%s166]
            %176 = vst [vmem:[%s174] sm:%s166] %v175
            %v177 = vld [vmem:[%s173 + $0x8] sm:%s166]
            %178 = vst [vmem:[%s174 + $0x4] sm:%s166] %v177
          $region145: #{fins_encoder_block.2} parent=139 // loop_footer
            %s172 = sadd.s32 1, %s168
          $region146: #{fins_encoder_block.2} parent=139 // loop_footer_branch
            %167 = sbr.rel target = $region142
          $region147: #{fins_encoder_block.2} parent=139 // loop_exit
            _
        $region140: #{fins_encoder_block.2} parent=131 // pred_fallthru
          _
      $region132: #{fins_encoder_block.2} parent=127 // pred_fallthru
        _
      %203 = vnop
    $region128: #{fins_encoder_block.2} parent=1 // pred_fallthru
      _
    // Predicated region
    $region166: #{fins_encoder_block.2} parent=1 // pred_check
      _
    $region167: #{fins_encoder_block.2} parent=1 // pred_check_branch
      %205 = sbr.rel (0) target = $region169
    $region168: #{fins_encoder_block.2} parent=1 // pred_region
      _
    $region169: #{fins_encoder_block.2} parent=1 // pred_fallthru
      _
    // Predicated region
    $region170: #{fins_encoder_block.2} parent=1 // pred_check
      _
    $region171: #{fins_encoder_block.2} parent=1 // pred_check_branch
      %207 = sbr.rel (0) target = $region173
    $region172: #{fins_encoder_block.2} parent=1 // pred_region
      _
    $region173: #{fins_encoder_block.2} parent=1 // pred_fallthru
      _
    // Predicated region
    $region174: #{fins_encoder_block.2} parent=1 // pred_check
      _
    $region175: #{fins_encoder_block.2} parent=1 // pred_check_branch
      %209 = sbr.rel (0) target = $region177
    $region176: #{fins_encoder_block.2} parent=1 // pred_region
      _
    $region177: #{fins_encoder_block.2} parent=1 // pred_fallthru
      _
    // Predicated region
    $region178: #{fins_encoder_block.2} parent=1 // pred_check
      _
    $region179: #{fins_encoder_block.2} parent=1 // pred_check_branch
      %211 = sbr.rel (0) target = $region181
    $region180: #{fins_encoder_block.2} parent=1 // pred_region
      _
    $region181: #{fins_encoder_block.2} parent=1 // pred_fallthru
      _
    // Predicated region
    $region182: #{fins_encoder_block.2} parent=1 // pred_check
      _
    $region183: #{fins_encoder_block.2} parent=1 // pred_check_branch
      %213 = sbr.rel (0) target = $region185
    $region184: #{fins_encoder_block.2} parent=1 // pred_region
      _
    $region185: #{fins_encoder_block.2} parent=1 // pred_fallthru
      _
    %s214 = sadd.s32 0, 1
    %s215 = sadd.s32 0, 1
    %v216 = vld [vmem:[%s4] sm:$0xff]
    %v217 = vld [vmem:[%s4 + $0x8] sm:$0xff]
    %v218 = vlaneseq
    %v219 = vand.u32 %v218, 127
    %s220 = smul.u32 0, 128
    %v221 = vstv %s220
    %v222 = vadd.s32 %v221, %v219
    %vm223 = vcmp.lt.s32.totalorder %v222, 8
    loop: start=0, step=1, limit=2
    $region186: #{fins_encoder_block.2} parent=1 // loop_pre_header
      _
    $region187: #{fins_encoder_block.2} parent=1 // loop_header
      %s225 = sphi 0, %s229
      %p226 = scmp.ge.s32.totalorder %s225, 2
      %v230 = vphi 0.0, %v434
      %v231 = vphi 0.0, %v435
      %v232 = vphi 0.0, %v442
      %v233 = vphi 0.0, %v443
    $region188: #{fins_encoder_block.2} parent=1 // loop_header_branch
      %228 = sbr.rel (%p226) target = $region192
    $region189: #{fins_encoder_block.2} parent=1 // loop_body
      %s234 = smul.u32 %s225, 4
      %s235 = scalar_lea.vmem [#allocation2], %s234
      %v236 = vld [vmem:[%s235] sm:$0xf]
      %s237 = scalar_lea.vmem [#allocation3], %s234
      %v238 = vld [vmem:[%s237] sm:$0xf]
      %s239 = scalar_lea.vmem [#allocation4], %s234
      %v240 = vld [vmem:[%s239] sm:$0xf]
      %s241 = scalar_lea.vmem [#allocation5], %s234
      %v242 = vld [vmem:[%s241] sm:$0xf]
      %v244 = vrot.slane %v240, 4
      %248 = vrot.lane.b32.xlu0 %v236, 127
      %v249 = vpop.permute.xlu0 %248
      %250 = vrot.lane.b32.xlu0 %v238, 127
      %v251 = vpop.permute.xlu0 %250
      %vm252 = vcmask 1039360
      %v253 = vsel %vm252, %v249, %v251
      %v256 = vrot.slane %v242, 4
      %257 = vrot.lane.b32.xlu0 %v244, 127
      %v258 = vpop.permute.xlu0 %257
      %259 = vrot.lane.b32.xlu0 %v256, 127
      %v260 = vpop.permute.xlu0 %259
      %v261 = vsel %vm252, %v258, %v260
      %263 = vrot.lane.b32.xlu0 %v236, 126
      %v264 = vpop.permute.xlu0 %263
      %265 = vrot.lane.b32.xlu0 %v238, 126
      %v266 = vpop.permute.xlu0 %265
      %vm267 = vcmask 1031168
      %v268 = vsel %vm267, %v264, %v266
      %270 = vrot.lane.b32.xlu0 %v244, 126
      %v271 = vpop.permute.xlu0 %270
      %272 = vrot.lane.b32.xlu0 %v256, 126
      %v273 = vpop.permute.xlu0 %272
      %v274 = vsel %vm267, %v271, %v273
      %276 = vrot.lane.b32.xlu0 %v236, 125
      %v277 = vpop.permute.xlu0 %276
      %278 = vrot.lane.b32.xlu0 %v238, 125
      %v279 = vpop.permute.xlu0 %278
      %vm280 = vcmask 1022976
      %v281 = vsel %vm280, %v277, %v279
      %283 = vrot.lane.b32.xlu0 %v244, 125
      %v284 = vpop.permute.xlu0 %283
      %285 = vrot.lane.b32.xlu0 %v256, 125
      %v286 = vpop.permute.xlu0 %285
      %v287 = vsel %vm280, %v284, %v286
      %289 = vrot.lane.b32.xlu0 %v236, 124
      %v290 = vpop.permute.xlu0 %289
      %291 = vrot.lane.b32.xlu0 %v238, 124
      %v292 = vpop.permute.xlu0 %291
      %vm293 = vcmask 1014784
      %v294 = vsel %vm293, %v290, %v292
      %296 = vrot.lane.b32.xlu0 %v244, 124
      %v297 = vpop.permute.xlu0 %296
      %298 = vrot.lane.b32.xlu0 %v256, 124
      %v299 = vpop.permute.xlu0 %298
      %v300 = vsel %vm293, %v297, %v299
      %302 = vrot.lane.b32.xlu0 %v236, 123
      %v303 = vpop.permute.xlu0 %302
      %304 = vrot.lane.b32.xlu0 %v238, 123
      %v305 = vpop.permute.xlu0 %304
      %vm306 = vcmask 1006592
      %v307 = vsel %vm306, %v303, %v305
      %309 = vrot.lane.b32.xlu0 %v244, 123
      %v310 = vpop.permute.xlu0 %309
      %311 = vrot.lane.b32.xlu0 %v256, 123
      %v312 = vpop.permute.xlu0 %311
      %v313 = vsel %vm306, %v310, %v312
      %315 = vrot.lane.b32.xlu0 %v236, 122
      %v316 = vpop.permute.xlu0 %315
      %317 = vrot.lane.b32.xlu0 %v238, 122
      %v318 = vpop.permute.xlu0 %317
      %vm319 = vcmask 998400
      %v320 = vsel %vm319, %v316, %v318
      %322 = vrot.lane.b32.xlu0 %v244, 122
      %v323 = vpop.permute.xlu0 %322
      %324 = vrot.lane.b32.xlu0 %v256, 122
      %v325 = vpop.permute.xlu0 %324
      %v326 = vsel %vm319, %v323, %v325
      %328 = vrot.lane.b32.xlu0 %v236, 121
      %v329 = vpop.permute.xlu0 %328
      %330 = vrot.lane.b32.xlu0 %v238, 121
      %v331 = vpop.permute.xlu0 %330
      %vm332 = vcmask 990208
      %v333 = vsel %vm332, %v329, %v331
      %vm334 = vcmask 1043456
      %v335 = vsel %vm334, %v236, %v244
      %v336 = vsel %vm334, %v253, %v261
      %v337 = vsel %vm334, %v268, %v274
      %v338 = vsel %vm334, %v281, %v287
      %v339 = vsel %vm334, %v294, %v300
      %v340 = vsel %vm334, %v307, %v313
      %v341 = vsel %vm334, %v320, %v326
      %vm342 = vcmask 490496
      %v344 = vsel %vm342, %v216, 0
      %v347 = vsel %vm342, %v217, 0
      %v349 = vsel %vm334, %v333, 0
      %351 = vmatprep.subr.mxu0 0.0
      %352 = vmatpush1.msra.mxu0 0.0
      %353 = vmatprep.subr.mxu0 0.0
      %354 = vmatpush1.msra.mxu0 0.0
      %355 = vmatprep.subr.mxu0 0.0
      %356 = vmatpush1.msra.mxu0 0.0
      %357 = vmatprep.subr.mxu0 0.0
      %358 = vmatpush1.msra.mxu0 0.0
      %359 = vmatprep.subr.mxu0 0.0
      %360 = vmatpush1.msra.mxu0 0.0
      %361 = vmatprep.subr.mxu0 0.0
      %362 = vmatpush1.msra.mxu0 0.0
      %363 = vmatprep.subr.mxu0 0.0
      %364 = vmatpush1.msra.mxu0 0.0
      %365 = vmatprep.subr.mxu0 0.0
      %366 = vmatpush1.msra.mxu0 0.0
      %367 = vmatprep.subr.mxu0 0.0
      %368 = vmatpush1.msra.mxu0 %v349
      %369 = vmatprep.subr.mxu0 0.0
      %370 = vmatpush1.msra.mxu0 %v341
      %371 = vmatprep.subr.mxu0 0.0
      %372 = vmatpush1.msra.mxu0 %v340
      %373 = vmatprep.subr.mxu0 0.0
      %374 = vmatpush1.msra.mxu0 %v339
      %375 = vmatprep.subr.mxu0 0.0
      %376 = vmatpush1.msra.mxu0 %v338
      %377 = vmatprep.subr.mxu0 0.0
      %378 = vmatpush1.msra.mxu0 %v337
      %379 = vmatprep.subr.mxu0 0.0
      %380 = vmatpush1.msra.mxu0 %v336
      %381 = vmatprep.subr.mxu0 0.0
      %382 = vmatpush1.msra.mxu0 %v335
      %383 = vmatprep.subr.mxu0 0.0
      %384 = vmatpush2.msra.mxu0 0.0
      %385 = vmatprep.subr.mxu0 0.0
      %386 = vmatpush2.msra.mxu0 0.0
      %387 = vmatprep.subr.mxu0 0.0
      %388 = vmatpush2.msra.mxu0 0.0
      %389 = vmatprep.subr.mxu0 0.0
      %390 = vmatpush2.msra.mxu0 0.0
      %391 = vmatprep.subr.mxu0 0.0
      %392 = vmatpush2.msra.mxu0 0.0
      %393 = vmatprep.subr.mxu0 0.0
      %394 = vmatpush2.msra.mxu0 0.0
      %395 = vmatprep.subr.mxu0 0.0
      %396 = vmatpush2.msra.mxu0 0.0
      %397 = vmatprep.subr.mxu0 0.0
      %398 = vmatpush2.msra.mxu0 0.0
      %399 = vmatprep.subr.mxu0 0.0
      %400 = vmatpush2.msra.mxu0 0.0
      %401 = vmatprep.subr.mxu0 0.0
      %402 = vmatpush2.msra.mxu0 0.0
      %403 = vmatprep.subr.mxu0 0.0
      %404 = vmatpush2.msra.mxu0 0.0
      %405 = vmatprep.subr.mxu0 0.0
      %406 = vmatpush2.msra.mxu0 0.0
      %407 = vmatprep.subr.mxu0 0.0
      %408 = vmatpush2.msra.mxu0 0.0
      %409 = vmatprep.subr.mxu0 0.0
      %410 = vmatpush2.msra.mxu0 0.0
      %411 = vmatprep.subr.mxu0 0.0
      %412 = vmatpush2.msra.mxu0 0.0
      %413 = vmatprep.subr.mxu0 0.0
      %414 = vmatpush2.msra.mxu0 0.0
      %415 = vmatprep.mubr.f32.mxu0 0.0
      %416 = vmatmul.mubr.f32.gmra.mxu0 %v344
      %v417 = vpop.f32.mrf.mxu0
      %v418 = vadd.f32 0.0, %v417
      %v419 = vpop.f32.mrf.mxu0
      %420 = vmatprep.mubr.f32.mxu0 0.0
      %421 = vmatmul.mubr.f32.gmra.mxu0 %v347
      %v422 = vpop.f32.mrf.mxu0
      %v423 = vadd.f32 0.0, %v422
      %v424 = vpop.f32.mrf.mxu0
      %425 = vdwg.mxu0
      %v426 = vsel %vm223, 1, 0
      %vm427 = vcmp.eq.s32.totalorder %v426, 1
      %v428 = vsel %vm427, %v418, 0.0
      %v429 = vsel %vm427, %v423, 0.0
      %430 = vadd.xlane.f32.xlu0 %v428
      %v431 = vpop.xlane.xlu0 %430
      %432 = vadd.xlane.f32.xlu0 %v429
      %v433 = vpop.xlane.xlu0 %432
      %v434 = vadd.f32 %v230, %v431
      %v435 = vadd.f32 %v231, %v433
      %v436 = vmul.f32 %v428, %v428
      %v437 = vmul.f32 %v429, %v429
      %438 = vadd.xlane.f32.xlu0 %v436
      %v439 = vpop.xlane.xlu0 %438
      %440 = vadd.xlane.f32.xlu0 %v437
      %v441 = vpop.xlane.xlu0 %440
      %v442 = vadd.f32 %v232, %v439
      %v443 = vadd.f32 %v233, %v441
    $region190: #{fins_encoder_block.2} parent=1 // loop_footer
      %s229 = sadd.s32 1, %s225
    $region191: #{fins_encoder_block.2} parent=1 // loop_footer_branch
      %224 = sbr.rel target = $region187
    $region192: #{fins_encoder_block.2} parent=1 // loop_exit
      _
    %vm444 = vcmask 7168
    %v445 = vsel %vm444, %v230, %v232
    %v446 = vsel %vm444, %v231, %v233
    %vm447 = vcmask 15360
    %448 = vst.msk [vmem:[%s5] sm:$0xff] %vm447, %v445
    %449 = vst.msk [vmem:[%s5 + $0x8] sm:$0xff] %vm447, %v446
    // Predicated region
    $region193: #{fins_encoder_block.2} parent=1 // pred_check
      _
    $region194: #{fins_encoder_block.2} parent=1 // pred_check_branch
      %451 = sbr.rel (0) target = $region196
    $region195: #{fins_encoder_block.2} parent=1 // pred_region
      _
    $region196: #{fins_encoder_block.2} parent=1 // pred_fallthru
      _
    // Predicated region
    $region197: #{fins_encoder_block.2} parent=1 // pred_check
      _
    $region198: #{fins_encoder_block.2} parent=1 // pred_check_branch
      %453 = sbr.rel (0) target = $region200
    $region199: #{fins_encoder_block.2} parent=1 // pred_region
      _
    $region200: #{fins_encoder_block.2} parent=1 // pred_fallthru
      _

// kernel: fins_encoder_block.3
$region0: #{fins_encoder_block.3}
  #allocation0 [shape = 'u32[]', space=smem, size = 0x4, offset = 0x4, fixed_abs, tag = 'smem constant byte address 0x4 - core index']
  #allocation1 [shape = 'u32[144,128]{1,0:T(1,128)}', space=vmem, size = 0x12000, scoped, tag = 'internal scratch']
  #allocation2 [shape = 'f32[1,1]{1,0:T(1,128)S(1)}', space=vmem, size = 0x200, scoped, tag = 'scoped memory for fins_encoder_block.3']
  %s0 = inlined_call_operand.vmem [shape: f32[2,4,256], index: 0, kind: input, shape index: {}, may-alias: {0,1}]
  %s1 = inlined_call_operand.vmem [shape: f32[2,4,256], index: 1, kind: input, shape index: {}, may-alias: {0,1}]
  %s2 = inlined_call_operand.vmem [shape: f32[2,4,256], index: 2, kind: input, shape index: {}, may-alias: {2,3}]
  %s3 = inlined_call_operand.vmem [shape: f32[2,4,256], index: 3, kind: input, shape index: {}, may-alias: {2,3}]
  %s4 = inlined_call_operand.vmem [shape: f32[16,60], index: 4, kind: input, shape index: {}]
  %s5 = inlined_call_operand.vmem [shape: f32[16,1], index: 5, kind: input, shape index: {}]
  %s6 = inlined_call_operand.vmem [shape: f32[16,1], index: 6, kind: input, shape index: {}]
  %s7 = inlined_call_operand.<no memory space> [shape: f32[1,1], index: 7, kind: input, shape index: {}]
  %s8 = inlined_call_operand.hbm [shape: f32[2,8,128], index: 8, kind: output, shape index: {}]
  %s9 = sld [smem:[#allocation0]]
  $region213: #{fins_encoder_block.3} parent=0
    _
  %s11 = ssub.s32 1, %s9
  %s12 = scalar_select 0, %s11, %s9
  %v13 = vstv %s7
  %14 = vst [vmem:[#allocation2] sm:$0x1] %v13
  $region1: #{fins_encoder_block.3} parent=0
    #allocation3 [shape = 'u8[4096]{0}', space=vmem, size = 0x1000, scoped, tag = 'input window, operand 0, single buffered']
    #allocation4 [shape = 'u8[4096]{0}', space=vmem, size = 0x1000, scoped, tag = 'input window, operand 1, single buffered']
    #allocation5 [shape = 'u8[4096]{0}', space=vmem, size = 0x1000, scoped, tag = 'input window, operand 2, single buffered']
    #allocation6 [shape = 'u8[4096]{0}', space=vmem, size = 0x1000, scoped, tag = 'input window, operand 3, single buffered']
    #allocation7 [shape = 'u8[8192]{0}', space=vmem, size = 0x2000, scoped, tag = 'output window, operand 0, single buffered']
    #allocation8 [shape = 's32[1]{0}', space=sflag, size = 0x4, scoped, tag = 'scoped memory for fins_encoder_block.3']
    %15 = vsyncpa [#allocation8], 0
    // Predicated region
    $region2: #{fins_encoder_block.3} parent=1 // pred_check
      _
    $region3: #{fins_encoder_block.3} parent=1 // pred_check_branch
      %17 = sbr.rel (0) target = $region5
    $region4: #{fins_encoder_block.3} parent=1 // pred_region
      // Predicated region
      $region6: #{fins_encoder_block.3} parent=4 // pred_check
        _
      $region7: #{fins_encoder_block.3} parent=4 // pred_check_branch
        %19 = sbr.rel (0) target = $region9
      $region8: #{fins_encoder_block.3} parent=4 // pred_region
        // Predicated region
        $region10: #{fins_encoder_block.3} parent=8 // pred_check
          _
        $region11: #{fins_encoder_block.3} parent=8 // pred_check_branch
          %21 = sbr.rel target = $region13
        $region12: #{fins_encoder_block.3} parent=8 // pred_region
          // Predicated region
          $region25: #{fins_encoder_block.3} parent=12 // pred_check
            _
          $region26: #{fins_encoder_block.3} parent=12 // pred_check_branch
            %39 = sbr.rel (0) target = $region28
          $region27: #{fins_encoder_block.3} parent=12 // pred_region
            loop: start=0, step=1, limit=1
            $region29: #{fins_encoder_block.3} parent=27 // loop_pre_header
              _
            $region30: #{fins_encoder_block.3} parent=27 // loop_header
              %s41 = sphi 0, %s45
              %p42 = scmp.ge.s32.totalorder %s41, 1
              %s46 = sphi %s0, %s0
              %s47 = sphi [#allocation3], [#allocation3]
            $region31: #{fins_encoder_block.3} parent=27 // loop_header_branch
              %44 = sbr.rel (%p42) target = $region35
            $region32: #{fins_encoder_block.3} parent=27 // loop_body
              _
            $region33: #{fins_encoder_block.3} parent=27 // loop_footer
              %s45 = sadd.s32 1, %s41
            $region34: #{fins_encoder_block.3} parent=27 // loop_footer_branch
              %40 = sbr.rel target = $region30
            $region35: #{fins_encoder_block.3} parent=27 // loop_exit
              _
            %s49 = ssub.s32 16, 1
            loop: start=0, step=1, limit=1
            $region36: #{fins_encoder_block.3} parent=27 // loop_pre_header
              _
            $region37: #{fins_encoder_block.3} parent=27 // loop_header
              %s51 = sphi 0, %s55
              %p52 = scmp.ge.s32.totalorder %s51, 1
              %s56 = sphi %s0, %s0
              %s57 = sphi [#allocation3], [#allocation3]
            $region38: #{fins_encoder_block.3} parent=27 // loop_header_branch
              %54 = sbr.rel (%p52) target = $region42
            $region39: #{fins_encoder_block.3} parent=27 // loop_body
              %v58 = vld [vmem:[%s56] sm:%s49]
              %59 = vst [vmem:[%s57] sm:%s49] %v58
              %v60 = vld [vmem:[%s56 + $0x8] sm:%s49]
              %61 = vst [vmem:[%s57 + $0x4] sm:%s49] %v60
            $region40: #{fins_encoder_block.3} parent=27 // loop_footer
              %s55 = sadd.s32 1, %s51
            $region41: #{fins_encoder_block.3} parent=27 // loop_footer_branch
              %50 = sbr.rel target = $region37
            $region42: #{fins_encoder_block.3} parent=27 // loop_exit
              _
          $region28: #{fins_encoder_block.3} parent=12 // pred_fallthru
            _
        $region13: #{fins_encoder_block.3} parent=8 // pred_fallthru
          _
        // Predicated region
        $region14: #{fins_encoder_block.3} parent=8 // pred_check
          _
        $region15: #{fins_encoder_block.3} parent=8 // pred_check_branch
          %23 = sbr.rel (0) target = $region17
        $region16: #{fins_encoder_block.3} parent=8 // pred_region
          %s25 = ssub.s32 16, 1
          loop: start=0, step=1, limit=1
          $region18: #{fins_encoder_block.3} parent=16 // loop_pre_header
            _
          $region19: #{fins_encoder_block.3} parent=16 // loop_header
            %s27 = sphi 0, %s31
            %p28 = scmp.ge.s32.totalorder %s27, 1
            %s32 = sphi %s0, %s0
            %s33 = sphi [#allocation3], [#allocation3]
          $region20: #{fins_encoder_block.3} parent=16 // loop_header_branch
            %30 = sbr.rel (%p28) target = $region24
          $region21: #{fins_encoder_block.3} parent=16 // loop_body
            %v34 = vld [vmem:[%s32] sm:%s25]
            %35 = vst [vmem:[%s33] sm:%s25] %v34
            %v36 = vld [vmem:[%s32 + $0x8] sm:%s25]
            %37 = vst [vmem:[%s33 + $0x4] sm:%s25] %v36
          $region22: #{fins_encoder_block.3} parent=16 // loop_footer
            %s31 = sadd.s32 1, %s27
          $region23: #{fins_encoder_block.3} parent=16 // loop_footer_branch
            %26 = sbr.rel target = $region19
          $region24: #{fins_encoder_block.3} parent=16 // loop_exit
            _
        $region17: #{fins_encoder_block.3} parent=8 // pred_fallthru
          _
      $region9: #{fins_encoder_block.3} parent=4 // pred_fallthru
        _
      %62 = vnop
    $region5: #{fins_encoder_block.3} parent=1 // pred_fallthru
      _
    // Predicated region
    $region43: #{fins_encoder_block.3} parent=1 // pred_check
      _
    $region44: #{fins_encoder_block.3} parent=1 // pred_check_branch
      %64 = sbr.rel (0) target = $region46
    $region45: #{fins_encoder_block.3} parent=1 // pred_region
      %s65 = sadd.s32 0, 1
      %s66 = smul.addr %s65, 4
      %s67 = scalar_lea.vmem %s1, %s66
      // Predicated region
      $region47: #{fins_encoder_block.3} parent=45 // pred_check
        _
      $region48: #{fins_encoder_block.3} parent=45 // pred_check_branch
        %69 = sbr.rel (0) target = $region50
      $region49: #{fins_encoder_block.3} parent=45 // pred_region
        // Predicated region
        $region51: #{fins_encoder_block.3} parent=49 // pred_check
          _
        $region52: #{fins_encoder_block.3} parent=49 // pred_check_branch
          %71 = sbr.rel target = $region54
        $region53: #{fins_encoder_block.3} parent=49 // pred_region
          // Predicated region
          $region66: #{fins_encoder_block.3} parent=53 // pred_check
            _
          $region67: #{fins_encoder_block.3} parent=53 // pred_check_branch
            %89 = sbr.rel (0) target = $region69
          $region68: #{fins_encoder_block.3} parent=53 // pred_region
            loop: start=0, step=1, limit=1
            $region70: #{fins_encoder_block.3} parent=68 // loop_pre_header
              _
            $region71: #{fins_encoder_block.3} parent=68 // loop_header
              %s91 = sphi 0, %s95
              %p92 = scmp.ge.s32.totalorder %s91, 1
              %s96 = sphi %s67, %s67
              %s97 = sphi [#allocation4], [#allocation4]
            $region72: #{fins_encoder_block.3} parent=68 // loop_header_branch
              %94 = sbr.rel (%p92) target = $region76
            $region73: #{fins_encoder_block.3} parent=68 // loop_body
              _
            $region74: #{fins_encoder_block.3} parent=68 // loop_footer
              %s95 = sadd.s32 1, %s91
            $region75: #{fins_encoder_block.3} parent=68 // loop_footer_branch
              %90 = sbr.rel target = $region71
            $region76: #{fins_encoder_block.3} parent=68 // loop_exit
              _
            %s99 = ssub.s32 16, 1
            loop: start=0, step=1, limit=1
            $region77: #{fins_encoder_block.3} parent=68 // loop_pre_header
              _
            $region78: #{fins_encoder_block.3} parent=68 // loop_header
              %s101 = sphi 0, %s105
              %p102 = scmp.ge.s32.totalorder %s101, 1
              %s106 = sphi %s67, %s67
              %s107 = sphi [#allocation4], [#allocation4]
            $region79: #{fins_encoder_block.3} parent=68 // loop_header_branch
              %104 = sbr.rel (%p102) target = $region83
            $region80: #{fins_encoder_block.3} parent=68 // loop_body
              %v108 = vld [vmem:[%s106] sm:%s99]
              %109 = vst [vmem:[%s107] sm:%s99] %v108
              %v110 = vld [vmem:[%s106 + $0x8] sm:%s99]
              %111 = vst [vmem:[%s107 + $0x4] sm:%s99] %v110
            $region81: #{fins_encoder_block.3} parent=68 // loop_footer
              %s105 = sadd.s32 1, %s101
            $region82: #{fins_encoder_block.3} parent=68 // loop_footer_branch
              %100 = sbr.rel target = $region78
            $region83: #{fins_encoder_block.3} parent=68 // loop_exit
              _
          $region69: #{fins_encoder_block.3} parent=53 // pred_fallthru
            _
        $region54: #{fins_encoder_block.3} parent=49 // pred_fallthru
          _
        // Predicated region
        $region55: #{fins_encoder_block.3} parent=49 // pred_check
          _
        $region56: #{fins_encoder_block.3} parent=49 // pred_check_branch
          %73 = sbr.rel (0) target = $region58
        $region57: #{fins_encoder_block.3} parent=49 // pred_region
          %s75 = ssub.s32 16, 1
          loop: start=0, step=1, limit=1
          $region59: #{fins_encoder_block.3} parent=57 // loop_pre_header
            _
          $region60: #{fins_encoder_block.3} parent=57 // loop_header
            %s77 = sphi 0, %s81
            %p78 = scmp.ge.s32.totalorder %s77, 1
            %s82 = sphi %s67, %s67
            %s83 = sphi [#allocation4], [#allocation4]
          $region61: #{fins_encoder_block.3} parent=57 // loop_header_branch
            %80 = sbr.rel (%p78) target = $region65
          $region62: #{fins_encoder_block.3} parent=57 // loop_body
            %v84 = vld [vmem:[%s82] sm:%s75]
            %85 = vst [vmem:[%s83] sm:%s75] %v84
            %v86 = vld [vmem:[%s82 + $0x8] sm:%s75]
            %87 = vst [vmem:[%s83 + $0x4] sm:%s75] %v86
          $region63: #{fins_encoder_block.3} parent=57 // loop_footer
            %s81 = sadd.s32 1, %s77
          $region64: #{fins_encoder_block.3} parent=57 // loop_footer_branch
            %76 = sbr.rel target = $region60
          $region65: #{fins_encoder_block.3} parent=57 // loop_exit
            _
        $region58: #{fins_encoder_block.3} parent=49 // pred_fallthru
          _
      $region50: #{fins_encoder_block.3} parent=45 // pred_fallthru
        _
      %112 = vnop
    $region46: #{fins_encoder_block.3} parent=1 // pred_fallthru
      _
    // Predicated region
    $region84: #{fins_encoder_block.3} parent=1 // pred_check
      _
    $region85: #{fins_encoder_block.3} parent=1 // pred_check_branch
      %114 = sbr.rel (0) target = $region87
    $region86: #{fins_encoder_block.3} parent=1 // pred_region
      // Predicated region
      $region88: #{fins_encoder_block.3} parent=86 // pred_check
        _
      $region89: #{fins_encoder_block.3} parent=86 // pred_check_branch
        %116 = sbr.rel (0) target = $region91
      $region90: #{fins_encoder_block.3} parent=86 // pred_region
        // Predicated region
        $region92: #{fins_encoder_block.3} parent=90 // pred_check
          _
        $region93: #{fins_encoder_block.3} parent=90 // pred_check_branch
          %118 = sbr.rel target = $region95
        $region94: #{fins_encoder_block.3} parent=90 // pred_region
          // Predicated region
          $region107: #{fins_encoder_block.3} parent=94 // pred_check
            _
          $region108: #{fins_encoder_block.3} parent=94 // pred_check_branch
            %136 = sbr.rel (0) target = $region110
          $region109: #{fins_encoder_block.3} parent=94 // pred_region
            loop: start=0, step=1, limit=1
            $region111: #{fins_encoder_block.3} parent=109 // loop_pre_header
              _
            $region112: #{fins_encoder_block.3} parent=109 // loop_header
              %s138 = sphi 0, %s142
              %p139 = scmp.ge.s32.totalorder %s138, 1
              %s143 = sphi %s2, %s2
              %s144 = sphi [#allocation5], [#allocation5]
            $region113: #{fins_encoder_block.3} parent=109 // loop_header_branch
              %141 = sbr.rel (%p139) target = $region117
            $region114: #{fins_encoder_block.3} parent=109 // loop_body
              _
            $region115: #{fins_encoder_block.3} parent=109 // loop_footer
              %s142 = sadd.s32 1, %s138
            $region116: #{fins_encoder_block.3} parent=109 // loop_footer_branch
              %137 = sbr.rel target = $region112
            $region117: #{fins_encoder_block.3} parent=109 // loop_exit
              _
            %s146 = ssub.s32 16, 1
            loop: start=0, step=1, limit=1
            $region118: #{fins_encoder_block.3} parent=109 // loop_pre_header
              _
            $region119: #{fins_encoder_block.3} parent=109 // loop_header
              %s148 = sphi 0, %s152
              %p149 = scmp.ge.s32.totalorder %s148, 1
              %s153 = sphi %s2, %s2
              %s154 = sphi [#allocation5], [#allocation5]
            $region120: #{fins_encoder_block.3} parent=109 // loop_header_branch
              %151 = sbr.rel (%p149) target = $region124
            $region121: #{fins_encoder_block.3} parent=109 // loop_body
              %v155 = vld [vmem:[%s153] sm:%s146]
              %156 = vst [vmem:[%s154] sm:%s146] %v155
              %v157 = vld [vmem:[%s153 + $0x8] sm:%s146]
              %158 = vst [vmem:[%s154 + $0x4] sm:%s146] %v157
            $region122: #{fins_encoder_block.3} parent=109 // loop_footer
              %s152 = sadd.s32 1, %s148
            $region123: #{fins_encoder_block.3} parent=109 // loop_footer_branch
              %147 = sbr.rel target = $region119
            $region124: #{fins_encoder_block.3} parent=109 // loop_exit
              _
          $region110: #{fins_encoder_block.3} parent=94 // pred_fallthru
            _
        $region95: #{fins_encoder_block.3} parent=90 // pred_fallthru
          _
        // Predicated region
        $region96: #{fins_encoder_block.3} parent=90 // pred_check
          _
        $region97: #{fins_encoder_block.3} parent=90 // pred_check_branch
          %120 = sbr.rel (0) target = $region99
        $region98: #{fins_encoder_block.3} parent=90 // pred_region
          %s122 = ssub.s32 16, 1
          loop: start=0, step=1, limit=1
          $region100: #{fins_encoder_block.3} parent=98 // loop_pre_header
            _
          $region101: #{fins_encoder_block.3} parent=98 // loop_header
            %s124 = sphi 0, %s128
            %p125 = scmp.ge.s32.totalorder %s124, 1
            %s129 = sphi %s2, %s2
            %s130 = sphi [#allocation5], [#allocation5]
          $region102: #{fins_encoder_block.3} parent=98 // loop_header_branch
            %127 = sbr.rel (%p125) target = $region106
          $region103: #{fins_encoder_block.3} parent=98 // loop_body
            %v131 = vld [vmem:[%s129] sm:%s122]
            %132 = vst [vmem:[%s130] sm:%s122] %v131
            %v133 = vld [vmem:[%s129 + $0x8] sm:%s122]
            %134 = vst [vmem:[%s130 + $0x4] sm:%s122] %v133
          $region104: #{fins_encoder_block.3} parent=98 // loop_footer
            %s128 = sadd.s32 1, %s124
          $region105: #{fins_encoder_block.3} parent=98 // loop_footer_branch
            %123 = sbr.rel target = $region101
          $region106: #{fins_encoder_block.3} parent=98 // loop_exit
            _
        $region99: #{fins_encoder_block.3} parent=90 // pred_fallthru
          _
      $region91: #{fins_encoder_block.3} parent=86 // pred_fallthru
        _
      %159 = vnop
    $region87: #{fins_encoder_block.3} parent=1 // pred_fallthru
      _
    // Predicated region
    $region125: #{fins_encoder_block.3} parent=1 // pred_check
      _
    $region126: #{fins_encoder_block.3} parent=1 // pred_check_branch
      %161 = sbr.rel (0) target = $region128
    $region127: #{fins_encoder_block.3} parent=1 // pred_region
      %s162 = sadd.s32 0, 1
      %s163 = smul.addr %s162, 4
      %s164 = scalar_lea.vmem %s3, %s163
      // Predicated region
      $region129: #{fins_encoder_block.3} parent=127 // pred_check
        _
      $region130: #{fins_encoder_block.3} parent=127 // pred_check_branch
        %166 = sbr.rel (0) target = $region132
      $region131: #{fins_encoder_block.3} parent=127 // pred_region
        // Predicated region
        $region133: #{fins_encoder_block.3} parent=131 // pred_check
          _
        $region134: #{fins_encoder_block.3} parent=131 // pred_check_branch
          %168 = sbr.rel target = $region136
        $region135: #{fins_encoder_block.3} parent=131 // pred_region
          // Predicated region
          $region148: #{fins_encoder_block.3} parent=135 // pred_check
            _
          $region149: #{fins_encoder_block.3} parent=135 // pred_check_branch
            %186 = sbr.rel (0) target = $region151
          $region150: #{fins_encoder_block.3} parent=135 // pred_region
            loop: start=0, step=1, limit=1
            $region152: #{fins_encoder_block.3} parent=150 // loop_pre_header
              _
            $region153: #{fins_encoder_block.3} parent=150 // loop_header
              %s188 = sphi 0, %s192
              %p189 = scmp.ge.s32.totalorder %s188, 1
              %s193 = sphi %s164, %s164
              %s194 = sphi [#allocation6], [#allocation6]
            $region154: #{fins_encoder_block.3} parent=150 // loop_header_branch
              %191 = sbr.rel (%p189) target = $region158
            $region155: #{fins_encoder_block.3} parent=150 // loop_body
              _
            $region156: #{fins_encoder_block.3} parent=150 // loop_footer
              %s192 = sadd.s32 1, %s188
            $region157: #{fins_encoder_block.3} parent=150 // loop_footer_branch
              %187 = sbr.rel target = $region153
            $region158: #{fins_encoder_block.3} parent=150 // loop_exit
              _
            %s196 = ssub.s32 16, 1
            loop: start=0, step=1, limit=1
            $region159: #{fins_encoder_block.3} parent=150 // loop_pre_header
              _
            $region160: #{fins_encoder_block.3} parent=150 // loop_header
              %s198 = sphi 0, %s202
              %p199 = scmp.ge.s32.totalorder %s198, 1
              %s203 = sphi %s164, %s164
              %s204 = sphi [#allocation6], [#allocation6]
            $region161: #{fins_encoder_block.3} parent=150 // loop_header_branch
              %201 = sbr.rel (%p199) target = $region165
            $region162: #{fins_encoder_block.3} parent=150 // loop_body
              %v205 = vld [vmem:[%s203] sm:%s196]
              %206 = vst [vmem:[%s204] sm:%s196] %v205
              %v207 = vld [vmem:[%s203 + $0x8] sm:%s196]
              %208 = vst [vmem:[%s204 + $0x4] sm:%s196] %v207
            $region163: #{fins_encoder_block.3} parent=150 // loop_footer
              %s202 = sadd.s32 1, %s198
            $region164: #{fins_encoder_block.3} parent=150 // loop_footer_branch
              %197 = sbr.rel target = $region160
            $region165: #{fins_encoder_block.3} parent=150 // loop_exit
              _
          $region151: #{fins_encoder_block.3} parent=135 // pred_fallthru
            _
        $region136: #{fins_encoder_block.3} parent=131 // pred_fallthru
          _
        // Predicated region
        $region137: #{fins_encoder_block.3} parent=131 // pred_check
          _
        $region138: #{fins_encoder_block.3} parent=131 // pred_check_branch
          %170 = sbr.rel (0) target = $region140
        $region139: #{fins_encoder_block.3} parent=131 // pred_region
          %s172 = ssub.s32 16, 1
          loop: start=0, step=1, limit=1
          $region141: #{fins_encoder_block.3} parent=139 // loop_pre_header
            _
          $region142: #{fins_encoder_block.3} parent=139 // loop_header
            %s174 = sphi 0, %s178
            %p175 = scmp.ge.s32.totalorder %s174, 1
            %s179 = sphi %s164, %s164
            %s180 = sphi [#allocation6], [#allocation6]
          $region143: #{fins_encoder_block.3} parent=139 // loop_header_branch
            %177 = sbr.rel (%p175) target = $region147
          $region144: #{fins_encoder_block.3} parent=139 // loop_body
            %v181 = vld [vmem:[%s179] sm:%s172]
            %182 = vst [vmem:[%s180] sm:%s172] %v181
            %v183 = vld [vmem:[%s179 + $0x8] sm:%s172]
            %184 = vst [vmem:[%s180 + $0x4] sm:%s172] %v183
          $region145: #{fins_encoder_block.3} parent=139 // loop_footer
            %s178 = sadd.s32 1, %s174
          $region146: #{fins_encoder_block.3} parent=139 // loop_footer_branch
            %173 = sbr.rel target = $region142
          $region147: #{fins_encoder_block.3} parent=139 // loop_exit
            _
        $region140: #{fins_encoder_block.3} parent=131 // pred_fallthru
          _
      $region132: #{fins_encoder_block.3} parent=127 // pred_fallthru
        _
      %209 = vnop
    $region128: #{fins_encoder_block.3} parent=1 // pred_fallthru
      _
    // Predicated region
    $region166: #{fins_encoder_block.3} parent=1 // pred_check
      _
    $region167: #{fins_encoder_block.3} parent=1 // pred_check_branch
      %211 = sbr.rel (0) target = $region169
    $region168: #{fins_encoder_block.3} parent=1 // pred_region
      _
    $region169: #{fins_encoder_block.3} parent=1 // pred_fallthru
      _
    // Predicated region
    $region170: #{fins_encoder_block.3} parent=1 // pred_check
      _
    $region171: #{fins_encoder_block.3} parent=1 // pred_check_branch
      %213 = sbr.rel (0) target = $region173
    $region172: #{fins_encoder_block.3} parent=1 // pred_region
      _
    $region173: #{fins_encoder_block.3} parent=1 // pred_fallthru
      _
    // Predicated region
    $region174: #{fins_encoder_block.3} parent=1 // pred_check
      _
    $region175: #{fins_encoder_block.3} parent=1 // pred_check_branch
      %215 = sbr.rel (0) target = $region177
    $region176: #{fins_encoder_block.3} parent=1 // pred_region
      _
    $region177: #{fins_encoder_block.3} parent=1 // pred_fallthru
      _
    // Predicated region
    $region178: #{fins_encoder_block.3} parent=1 // pred_check
      _
    $region179: #{fins_encoder_block.3} parent=1 // pred_check_branch
      %217 = sbr.rel (0) target = $region181
    $region180: #{fins_encoder_block.3} parent=1 // pred_region
      _
    $region181: #{fins_encoder_block.3} parent=1 // pred_fallthru
      _
    // Predicated region
    $region182: #{fins_encoder_block.3} parent=1 // pred_check
      _
    $region183: #{fins_encoder_block.3} parent=1 // pred_check_branch
      %219 = sbr.rel (0) target = $region185
    $region184: #{fins_encoder_block.3} parent=1 // pred_region
      _
    $region185: #{fins_encoder_block.3} parent=1 // pred_fallthru
      _
    // Predicated region
    $region186: #{fins_encoder_block.3} parent=1 // pred_check
      _
    $region187: #{fins_encoder_block.3} parent=1 // pred_check_branch
      %221 = sbr.rel (0) target = $region189
    $region188: #{fins_encoder_block.3} parent=1 // pred_region
      _
    $region189: #{fins_encoder_block.3} parent=1 // pred_fallthru
      _
    // Predicated region
    $region190: #{fins_encoder_block.3} parent=1 // pred_check
      _
    $region191: #{fins_encoder_block.3} parent=1 // pred_check_branch
      %223 = sbr.rel (0) target = $region193
    $region192: #{fins_encoder_block.3} parent=1 // pred_region
      _
    $region193: #{fins_encoder_block.3} parent=1 // pred_fallthru
      _
    // Predicated region
    $region194: #{fins_encoder_block.3} parent=1 // pred_check
      _
    $region195: #{fins_encoder_block.3} parent=1 // pred_check_branch
      %225 = sbr.rel (0) target = $region197
    $region196: #{fins_encoder_block.3} parent=1 // pred_region
      _
    $region197: #{fins_encoder_block.3} parent=1 // pred_fallthru
      _
    %s226 = sadd.s32 0, 1
    %s227 = sadd.s32 0, 1
    %v228 = vld [vmem:[%s4] sm:$0xff]
    %v229 = vld [vmem:[%s4 + $0x8] sm:$0xff]
    %v230 = vld [vmem:[%s5] sm:$0xff]
    %v231 = vld [vmem:[%s5 + $0x8] sm:$0xff]
    %v232 = vld [vmem:[%s6] sm:$0xff]
    %v233 = vld [vmem:[%s6 + $0x8] sm:$0xff]
    %v234 = vld [vmem:[#allocation2] sm:$0x1]
    loop: start=0, step=1, limit=2
    $region198: #{fins_encoder_block.3} parent=1 // loop_pre_header
      _
    $region199: #{fins_encoder_block.3} parent=1 // loop_header
      %s236 = sphi 0, %s240
      %p237 = scmp.ge.s32.totalorder %s236, 2
    $region200: #{fins_encoder_block.3} parent=1 // loop_header_branch
      %239 = sbr.rel (%p237) target = $region204
    $region201: #{fins_encoder_block.3} parent=1 // loop_body
      %s241 = smul.u32 %s236, 4
      %s242 = scalar_lea.vmem [#allocation3], %s241
      %v243 = vld [vmem:[%s242] sm:$0xf]
      %s244 = scalar_lea.vmem [#allocation4], %s241
      %v245 = vld [vmem:[%s244] sm:$0xf]
      %s246 = scalar_lea.vmem [#allocation5], %s241
      %v247 = vld [vmem:[%s246] sm:$0xf]
      %s248 = scalar_lea.vmem [#allocation6], %s241
      %v249 = vld [vmem:[%s248] sm:$0xf]
      %v251 = vrot.slane %v247, 4
      %255 = vrot.lane.b32.xlu0 %v243, 127
      %v256 = vpop.permute.xlu0 %255
      %257 = vrot.lane.b32.xlu0 %v245, 127
      %v258 = vpop.permute.xlu0 %257
      %vm259 = vcmask 1039360
      %v260 = vsel %vm259, %v256, %v258
      %v263 = vrot.slane %v249, 4
      %264 = vrot.lane.b32.xlu0 %v251, 127
      %v265 = vpop.permute.xlu0 %264
      %266 = vrot.lane.b32.xlu0 %v263, 127
      %v267 = vpop.permute.xlu0 %266
      %v268 = vsel %vm259, %v265, %v267
      %270 = vrot.lane.b32.xlu0 %v243, 126
      %v271 = vpop.permute.xlu0 %270
      %272 = vrot.lane.b32.xlu0 %v245, 126
      %v273 = vpop.permute.xlu0 %272
      %vm274 = vcmask 1031168
      %v275 = vsel %vm274, %v271, %v273
      %277 = vrot.lane.b32.xlu0 %v251, 126
      %v278 = vpop.permute.xlu0 %277
      %279 = vrot.lane.b32.xlu0 %v263, 126
      %v280 = vpop.permute.xlu0 %279
      %v281 = vsel %vm274, %v278, %v280
      %283 = vrot.lane.b32.xlu0 %v243, 125
      %v284 = vpop.permute.xlu0 %283
      %285 = vrot.lane.b32.xlu0 %v245, 125
      %v286 = vpop.permute.xlu0 %285
      %vm287 = vcmask 1022976
      %v288 = vsel %vm287, %v284, %v286
      %290 = vrot.lane.b32.xlu0 %v251, 125
      %v291 = vpop.permute.xlu0 %290
      %292 = vrot.lane.b32.xlu0 %v263, 125
      %v293 = vpop.permute.xlu0 %292
      %v294 = vsel %vm287, %v291, %v293
      %296 = vrot.lane.b32.xlu0 %v243, 124
      %v297 = vpop.permute.xlu0 %296
      %298 = vrot.lane.b32.xlu0 %v245, 124
      %v299 = vpop.permute.xlu0 %298
      %vm300 = vcmask 1014784
      %v301 = vsel %vm300, %v297, %v299
      %303 = vrot.lane.b32.xlu0 %v251, 124
      %v304 = vpop.permute.xlu0 %303
      %305 = vrot.lane.b32.xlu0 %v263, 124
      %v306 = vpop.permute.xlu0 %305
      %v307 = vsel %vm300, %v304, %v306
      %309 = vrot.lane.b32.xlu0 %v243, 123
      %v310 = vpop.permute.xlu0 %309
      %311 = vrot.lane.b32.xlu0 %v245, 123
      %v312 = vpop.permute.xlu0 %311
      %vm313 = vcmask 1006592
      %v314 = vsel %vm313, %v310, %v312
      %316 = vrot.lane.b32.xlu0 %v251, 123
      %v317 = vpop.permute.xlu0 %316
      %318 = vrot.lane.b32.xlu0 %v263, 123
      %v319 = vpop.permute.xlu0 %318
      %v320 = vsel %vm313, %v317, %v319
      %322 = vrot.lane.b32.xlu0 %v243, 122
      %v323 = vpop.permute.xlu0 %322
      %324 = vrot.lane.b32.xlu0 %v245, 122
      %v325 = vpop.permute.xlu0 %324
      %vm326 = vcmask 998400
      %v327 = vsel %vm326, %v323, %v325
      %329 = vrot.lane.b32.xlu0 %v251, 122
      %v330 = vpop.permute.xlu0 %329
      %331 = vrot.lane.b32.xlu0 %v263, 122
      %v332 = vpop.permute.xlu0 %331
      %v333 = vsel %vm326, %v330, %v332
      %335 = vrot.lane.b32.xlu0 %v243, 121
      %v336 = vpop.permute.xlu0 %335
      %337 = vrot.lane.b32.xlu0 %v245, 121
      %v338 = vpop.permute.xlu0 %337
      %vm339 = vcmask 990208
      %v340 = vsel %vm339, %v336, %v338
      %vm341 = vcmask 1043456
      %v342 = vsel %vm341, %v243, %v251
      %v343 = vsel %vm341, %v260, %v268
      %v344 = vsel %vm341, %v275, %v281
      %v345 = vsel %vm341, %v288, %v294
      %v346 = vsel %vm341, %v301, %v307
      %v347 = vsel %vm341, %v314, %v320
      %v348 = vsel %vm341, %v327, %v333
      %vm349 = vcmask 490496
      %v351 = vsel %vm349, %v228, 0
      %v354 = vsel %vm349, %v229, 0
      %v356 = vsel %vm341, %v340, 0
      %358 = vmatprep.subr.mxu0 0.0
      %359 = vmatpush1.msra.mxu0 0.0
      %360 = vmatprep.subr.mxu0 0.0
      %361 = vmatpush1.msra.mxu0 0.0
      %362 = vmatprep.subr.mxu0 0.0
      %363 = vmatpush1.msra.mxu0 0.0
      %364 = vmatprep.subr.mxu0 0.0
      %365 = vmatpush1.msra.mxu0 0.0
      %366 = vmatprep.subr.mxu0 0.0
      %367 = vmatpush1.msra.mxu0 0.0
      %368 = vmatprep.subr.mxu0 0.0
      %369 = vmatpush1.msra.mxu0 0.0
      %370 = vmatprep.subr.mxu0 0.0
      %371 = vmatpush1.msra.mxu0 0.0
      %372 = vmatprep.subr.mxu0 0.0
      %373 = vmatpush1.msra.mxu0 0.0
      %374 = vmatprep.subr.mxu0 0.0
      %375 = vmatpush1.msra.mxu0 %v356
      %376 = vmatprep.subr.mxu0 0.0
      %377 = vmatpush1.msra.mxu0 %v348
      %378 = vmatprep.subr.mxu0 0.0
      %379 = vmatpush1.msra.mxu0 %v347
      %380 = vmatprep.subr.mxu0 0.0
      %381 = vmatpush1.msra.mxu0 %v346
      %382 = vmatprep.subr.mxu0 0.0
      %383 = vmatpush1.msra.mxu0 %v345
      %384 = vmatprep.subr.mxu0 0.0
      %385 = vmatpush1.msra.mxu0 %v344
      %386 = vmatprep.subr.mxu0 0.0
      %387 = vmatpush1.msra.mxu0 %v343
      %388 = vmatprep.subr.mxu0 0.0
      %389 = vmatpush1.msra.mxu0 %v342
      %390 = vmatprep.subr.mxu0 0.0
      %391 = vmatpush2.msra.mxu0 0.0
      %392 = vmatprep.subr.mxu0 0.0
      %393 = vmatpush2.msra.mxu0 0.0
      %394 = vmatprep.subr.mxu0 0.0
      %395 = vmatpush2.msra.mxu0 0.0
      %396 = vmatprep.subr.mxu0 0.0
      %397 = vmatpush2.msra.mxu0 0.0
      %398 = vmatprep.subr.mxu0 0.0
      %399 = vmatpush2.msra.mxu0 0.0
      %400 = vmatprep.subr.mxu0 0.0
      %401 = vmatpush2.msra.mxu0 0.0
      %402 = vmatprep.subr.mxu0 0.0
      %403 = vmatpush2.msra.mxu0 0.0
      %404 = vmatprep.subr.mxu0 0.0
      %405 = vmatpush2.msra.mxu0 0.0
      %406 = vmatprep.subr.mxu0 0.0
      %407 = vmatpush2.msra.mxu0 0.0
      %408 = vmatprep.subr.mxu0 0.0
      %409 = vmatpush2.msra.mxu0 0.0
      %410 = vmatprep.subr.mxu0 0.0
      %411 = vmatpush2.msra.mxu0 0.0
      %412 = vmatprep.subr.mxu0 0.0
      %413 = vmatpush2.msra.mxu0 0.0
      %414 = vmatprep.subr.mxu0 0.0
      %415 = vmatpush2.msra.mxu0 0.0
      %416 = vmatprep.subr.mxu0 0.0
      %417 = vmatpush2.msra.mxu0 0.0
      %418 = vmatprep.subr.mxu0 0.0
      %419 = vmatpush2.msra.mxu0 0.0
      %420 = vmatprep.subr.mxu0 0.0
      %421 = vmatpush2.msra.mxu0 0.0
      %422 = vmatprep.mubr.f32.mxu0 0.0
      %423 = vmatmul.mubr.f32.gmra.mxu0 %v351
      %v424 = vpop.f32.mrf.mxu0
      %v425 = vadd.f32 0.0, %v424
      %v426 = vpop.f32.mrf.mxu0
      %427 = vmatprep.mubr.f32.mxu0 0.0
      %428 = vmatmul.mubr.f32.gmra.mxu0 %v354
      %v429 = vpop.f32.mrf.mxu0
      %v430 = vadd.f32 0.0, %v429
      %v431 = vpop.f32.mrf.mxu0
      %432 = vdwg.mxu0
      %434 = vset.pattern.permute.xlu0 0
      %435 = vperm.xlu0 %434, %v230
      %v436 = vpop.permute.xlu0 %435
      %439 = vset.pattern.permute.xlu0 0
      %440 = vperm.xlu0 %439, %v231
      %v441 = vpop.permute.xlu0 %440
      %v443 = vmul.f32 %v425, %v436
      %v444 = vmul.f32 %v430, %v441
      %446 = vset.pattern.permute.xlu0 0
      %447 = vperm.xlu0 %446, %v232
      %v448 = vpop.permute.xlu0 %447
      %451 = vset.pattern.permute.xlu0 0
      %452 = vperm.xlu0 %451, %v233
      %v453 = vpop.permute.xlu0 %452
      %v455 = vadd.f32 %v443, %v448
      %v456 = vadd.f32 %v444, %v453
      %vm457 = vcmp.ge.f32.partialorder %v455, 0.0
      %v459 = vlaneseq
      %v460 = vshrl.u32 %v459, 7
      %v461 = vsub.s32 0, %v460
      %v462 = vrot.slane %v234, %v461
      %463 = vset.pattern.permute.xlu0 0
      %464 = vperm.xlu0 %463, %v462
      %v465 = vpop.permute.xlu0 %464
      %v467 = vmul.f32 %v465, %v455
      %v468 = vsel %vm457, %v455, %v467
      %v469 = vadd.f32 %v468, %v456
      %s470 = smul.u32 %s236, 8
      %s471 = scalar_lea.vmem [#allocation7], %s470
      %472 = vst [vmem:[%s471] sm:$0xff] %v469
    $region202: #{fins_encoder_block.3} parent=1 // loop_footer
      %s240 = sadd.s32 1, %s236
    $region203: #{fins_encoder_block.3} parent=1 // loop_footer_branch
      %235 = sbr.rel target = $region199
    $region204: #{fins_encoder_block.3} parent=1 // loop_exit
      _
    // Predicated region
    $region205: #{fins_encoder_block.3} parent=1 // pred_check
      _
    $region206: #{fins_encoder_block.3} parent=1 // pred_check_branch
      %474 = sbr.rel (0) target = $region208
    $region207: #{fins_encoder_block.3} parent=1 // pred_region
      %s476 = ssub.s32 256, 256
      %477 = vsyncadd [#allocation8], %s476
      %s478 = sshll.u32 [#allocation7], 4
      %s479 = int_to_ptr.vmem [resolvable:$true] %s478
      %484 = dma.vmem_to_hbm [thread:$0]  %s479, 256, %s8, [#allocation8], 128, 128, 8
    $region208: #{fins_encoder_block.3} parent=1 // pred_fallthru
      _
    // Predicated region
    $region209: #{fins_encoder_block.3} parent=1 // pred_check
      _
    $region210: #{fins_encoder_block.3} parent=1 // pred_check_branch
      %486 = sbr.rel (0) target = $region212
    $region211: #{fins_encoder_block.3} parent=1 // pred_region
      %487 = dma.done [#allocation8], 256
    $region212: #{fins_encoder_block.3} parent=1 // pred_fallthru
      _
    %488 = vsyncpa [#allocation8], 1

</llo_original>
